<compile_context>
chip_gen: v7x
topology: tpu7x:2x2x1
jax: 0.10.0
libtpu: 0.0.40
codegen_flags: <defaults>
</compile_context>

<pallas_src>
import jax
import jax.numpy as jnp
from jax.experimental import pallas as pl
from jax.experimental.pallas import tpu as pltpu


def _round_up(x, m):
    return (x + m - 1) // m * m


def lstm_kernel(x_ref, len_ref, wih_ref, whh_ref, b_ref, wfc_ref, bfc_ref,
                out_ref, xp_sc, h_sc, c_sc):
    """Dynamic-length LSTM, time-chunked over the grid, fused final FC.

    x_ref   : (TC*Bp, E)    this chunk's time-major inputs (batch padded)
    len_ref : (Bp, 1) int32 valid sequence lengths (0 for padded batch rows)
    wih_ref : (E, 4*Hp)     W_ih^T  (per-gate blocks zero-padded to Hp)
    whh_ref : (Hp, 4*Hp)    W_hh^T
    b_ref   : (1, 4*Hp)     b_ih + b_hh
    wfc_ref : (Hp, Pp)      W_fc^T (zero-padded)
    bfc_ref : (1, Pp)
    out_ref : (Bp, Pp)      fc(h_n), written on the last grid step only
    xp_sc   : (TC*Bp, 4*Hp) scratch for the hoisted per-chunk input projection
    h_sc,c_sc : (Bp, Hp)    hidden / cell state carried across grid steps
    """
    i = pl.program_id(0)
    n_chunks = pl.num_programs(0)
    TBc = x_ref.shape[0]
    Bp = len_ref.shape[0]
    Hp = whh_ref.shape[0]
    TC = TBc // Bp

    @pl.when(i == 0)
    def _():
        h_sc[...] = jnp.zeros_like(h_sc)
        c_sc[...] = jnp.zeros_like(c_sc)

    # Hoisted input projection for this chunk: ONE MXU matmul covering every
    # timestep of the chunk, off the serial recurrence chain.
    xp_sc[...] = (
        jnp.dot(x_ref[...], wih_ref[...], preferred_element_type=jnp.float32)
        + b_ref[...])

    seq_len = len_ref[...]                                # (Bp, 1) int32
    t0 = i * TC                                           # global time offset

    def step(s, carry):
        h, c = carry
        row = pl.multiple_of(s * Bp, Bp)                  # aligned sublane start
        g_x = xp_sc[pl.ds(row, Bp), :]                    # (Bp, 4*Hp) precomputed
        gates = g_x + jnp.dot(h, whh_ref[...],
                              preferred_element_type=jnp.float32)
        # Gate slices are lane-aligned (Hp is a multiple of 128).
        i_g = jax.nn.sigmoid(gates[:, 0:Hp])
        f_g = jax.nn.sigmoid(gates[:, Hp:2 * Hp])
        g_g = jnp.tanh(gates[:, 2 * Hp:3 * Hp])
        o_g = jax.nn.sigmoid(gates[:, 3 * Hp:4 * Hp])
        c_new = f_g * c + i_g * g_g
        h_new = o_g * jnp.tanh(c_new)
        valid = (t0 + s) < seq_len                        # (Bp, 1) bool
        # Freeze finished sequences with a single select per state tensor.
        c = jnp.where(valid, c_new, c)
        h = jnp.where(valid, h_new, h)
        return h, c

    h, c = jax.lax.fori_loop(0, TC, step, (h_sc[...], c_sc[...]), unroll=True)
    h_sc[...] = h
    c_sc[...] = c

    @pl.when(i == n_chunks - 1)
    def _():
        # Fused final linear layer; (Bp, Pp) = lane-dense, unmasked store.
        out_ref[...] = (
            jnp.dot(h, wfc_ref[...], preferred_element_type=jnp.float32)
            + bfc_ref[...])


def lstm_forward(text_indices, embedding_matrix, w_ih, w_hh, b_ih, b_hh,
                 w_fc, b_fc):
    """text_indices: (B, T) int32; returns (B, polarities_dim) float32."""
    B, T = text_indices.shape
    E = embedding_matrix.shape[1]
    H = w_hh.shape[1]            # w_hh: (4H, H)
    P = w_fc.shape[0]            # w_fc: (P, H)

    LANE, SUBLANE = 128, 8
    Hp = _round_up(H, LANE)      # lane-aligned gate blocks
    Pp = _round_up(P, LANE)      # lane-dense output
    Bp = _round_up(B, SUBLANE)   # sublane-aligned batch rows

    # Time chunking: bound VMEM by the chunk, pipeline x DMA against compute.
    TC = min(T, 32)
    Tp = _round_up(T, TC)
    n_chunks = Tp // TC

    # ---- glue (plain JAX): embedding gather + length computation ----------
    x = embedding_matrix[text_indices]                           # (B, T, E)
    x_len = jnp.sum(text_indices != 0, axis=-1).astype(jnp.int32)

    # Time-major, time+batch padded, flattened so each chunk's input
    # projection is a single (TC*Bp, E) @ (E, 4*Hp) matmul.
    x_tm = jnp.transpose(x, (1, 0, 2))                           # (T, B, E)
    x_tm = jnp.pad(x_tm, ((0, Tp - T), (0, Bp - B), (0, 0)))
    x_flat = x_tm.reshape(Tp * Bp, E)
    x_len_p = jnp.pad(x_len, (0, Bp - B)).reshape(Bp, 1)

    # ---- weight repacking: transpose + zero-pad each gate block to Hp ------
    def pad_gates(w):            # (4H, X) -> (4Hp, X), per-gate zero padding
        w4 = w.reshape(4, H, -1)
        return jnp.pad(w4, ((0, 0), (0, Hp - H), (0, 0))).reshape(4 * Hp, -1)

    w_ih_p = pad_gates(w_ih)                                     # (4Hp, E)
    w_hh_p = jnp.pad(pad_gates(w_hh), ((0, 0), (0, Hp - H)))     # (4Hp, Hp)
    bias_p = pad_gates((b_ih + b_hh).reshape(4 * H, 1)).reshape(1, 4 * Hp)
    w_fc_p = jnp.pad(w_fc, ((0, Pp - P), (0, Hp - H)))           # (Pp, Hp)
    b_fc_p = jnp.pad(b_fc, (0, Pp - P)).reshape(1, Pp)

    wih_t = w_ih_p.T             # (E, 4Hp)
    whh_t = w_hh_p.T             # (Hp, 4Hp)
    wfc_t = w_fc_p.T             # (Hp, Pp)

    out = pl.pallas_call(
        lstm_kernel,
        out_shape=jax.ShapeDtypeStruct((Bp, Pp), jnp.float32),
        grid=(n_chunks,),
        in_specs=[
            pl.BlockSpec((TC * Bp, E), lambda i: (i, 0)),    # x chunk (time-major)
            pl.BlockSpec((Bp, 1), lambda i: (0, 0)),         # lengths
            pl.BlockSpec((E, 4 * Hp), lambda i: (0, 0)),     # W_ih^T
            pl.BlockSpec((Hp, 4 * Hp), lambda i: (0, 0)),    # W_hh^T
            pl.BlockSpec((1, 4 * Hp), lambda i: (0, 0)),     # bias
            pl.BlockSpec((Hp, Pp), lambda i: (0, 0)),        # W_fc^T
            pl.BlockSpec((1, Pp), lambda i: (0, 0)),         # b_fc
        ],
        out_specs=pl.BlockSpec((Bp, Pp), lambda i: (0, 0)),
        scratch_shapes=[
            pltpu.VMEM((TC * Bp, 4 * Hp), jnp.float32),      # hoisted x-projection
            pltpu.VMEM((Bp, Hp), jnp.float32),               # h carry
            pltpu.VMEM((Bp, Hp), jnp.float32),               # c carry
        ],
        compiler_params=pltpu.CompilerParams(
            dimension_semantics=("arbitrary",),
            vmem_limit_bytes=32 * 1024 * 1024),
    )(x_flat, x_len_p, wih_t, whh_t, bias_p, wfc_t, b_fc_p)

    return out[:B, :P]


def reference_forward(text_indices, embedding_matrix, w_ih, w_hh, b_ih, b_hh,
                      w_fc, b_fc):
    """Pure-JAX reference of the PyTorch forward."""
    x = embedding_matrix[text_indices]                 # (B, T, E)
    x_len = jnp.sum(text_indices != 0, axis=-1)
    B, T, _ = x.shape
    H = w_hh.shape[1]

    def step(carry, inp):
        h, c = carry
        x_t, m = inp                                   # (B,E), (B,1)
        gates = x_t @ w_ih.T + h @ w_hh.T + b_ih + b_hh
        i = jax.nn.sigmoid(gates[:, 0:H])
        f = jax.nn.sigmoid(gates[:, H:2 * H])
        g = jnp.tanh(gates[:, 2 * H:3 * H])
        o = jax.nn.sigmoid(gates[:, 3 * H:4 * H])
        c_new = f * c + i * g
        h_new = o * jnp.tanh(c_new)
        c = m * c_new + (1 - m) * c
        h = m * h_new + (1 - m) * h
        return (h, c), None

    x_tm = jnp.transpose(x, (1, 0, 2))
    mask = (jnp.arange(T)[:, None] < x_len[None, :]).astype(jnp.float32)[:, :, None]
    (h, _), _ = jax.lax.scan(step, (jnp.zeros((B, H)), jnp.zeros((B, H))),
                             (x_tm, mask))
    return h @ w_fc.T + b_fc


if __name__ == "__main__":
    key = jax.random.PRNGKey(0)
    vocab, embed_dim, hidden_dim, polarities_dim = 20, 32, 32, 3
    B, T = 2, 8

    ks = jax.random.split(key, 8)
    # deterministic "pretrained" embedding matrix; row 0 is the pad embedding
    embedding_matrix = jax.random.normal(ks[0], (vocab, embed_dim),
                                         dtype=jnp.float32) * 0.1
    w_ih = jax.random.normal(ks[1], (4 * hidden_dim, embed_dim), jnp.float32) * 0.1
    w_hh = jax.random.normal(ks[2], (4 * hidden_dim, hidden_dim), jnp.float32) * 0.1
    b_ih = jax.random.normal(ks[3], (4 * hidden_dim,), jnp.float32) * 0.1
    b_hh = jax.random.normal(ks[4], (4 * hidden_dim,), jnp.float32) * 0.1
    w_fc = jax.random.normal(ks[5], (polarities_dim, hidden_dim), jnp.float32) * 0.1
    b_fc = jax.random.normal(ks[6], (polarities_dim,), jnp.float32) * 0.1

    # token indices with 0 = padding (variable lengths: 8 and 5)
    text_indices = jnp.array(
        [[3, 7, 1, 9, 4, 2, 8, 6],
         [5, 2, 11, 4, 9, 0, 0, 0]], dtype=jnp.int32)

    out = lstm_forward(text_indices, embedding_matrix, w_ih, w_hh, b_ih, b_hh,
                       w_fc, b_fc)
    out = jax.block_until_ready(out)

    ref = reference_forward(text_indices, embedding_matrix, w_ih, w_hh, b_ih,
                            b_hh, w_fc, b_fc)
    assert out.shape == (B, polarities_dim)
    assert jnp.allclose(out, ref, atol=1e-4, rtol=1e-4), (out, ref)
    print("KERNEL_OK")
</pallas_src>

<mosaic_0001>
module attributes {stable_mosaic.version = 11 : i64} {
  func.func @lstm_kernel(%arg0: i32, %arg1: memref<64x32xf32, #tpu.memory_space<vmem>>, %arg2: memref<8x1xi32, #tpu.memory_space<vmem>>, %arg3: memref<32x512xf32, #tpu.memory_space<vmem>>, %arg4: memref<128x512xf32, #tpu.memory_space<vmem>>, %arg5: memref<1x512xf32, #tpu.memory_space<vmem>>, %arg6: memref<128x128xf32, #tpu.memory_space<vmem>>, %arg7: memref<1x128xf32, #tpu.memory_space<vmem>>, %arg8: memref<8x128xf32, #tpu.memory_space<vmem>>, %arg9: memref<64x512xf32, #tpu.memory_space<vmem>>, %arg10: memref<8x128xf32, #tpu.memory_space<vmem>>, %arg11: memref<8x128xf32, #tpu.memory_space<vmem>>) attributes {dimension_semantics = [#tpu.dimension_semantics<arbitrary>], iteration_bounds = array<i64: 1>, scalar_prefetch = 0 : i64, scratch_operands = 3 : i64, tpu.core_type = #tpu.core_type<tc>, window_params = [{transform_indices = @transform_0, window_bounds = array<i64: 64, 32>}, {pipeline_mode = #tpu.pipeline_mode<synchronous>, transform_indices = @transform_1, window_bounds = array<i64: 8, 1>}, {pipeline_mode = #tpu.pipeline_mode<synchronous>, transform_indices = @transform_2, window_bounds = array<i64: 32, 512>}, {pipeline_mode = #tpu.pipeline_mode<synchronous>, transform_indices = @transform_3, window_bounds = array<i64: 128, 512>}, {pipeline_mode = #tpu.pipeline_mode<synchronous>, transform_indices = @transform_4, window_bounds = array<i64: 1, 512>}, {pipeline_mode = #tpu.pipeline_mode<synchronous>, transform_indices = @transform_5, window_bounds = array<i64: 128, 128>}, {pipeline_mode = #tpu.pipeline_mode<synchronous>, transform_indices = @transform_6, window_bounds = array<i64: 1, 128>}, {pipeline_mode = #tpu.pipeline_mode<synchronous>, transform_indices = @transform_7, window_bounds = array<i64: 8, 128>}]} {
    %c0_i32 = arith.constant 0 : i32
    %0 = arith.cmpi eq, %arg0, %c0_i32 : i32
    %1 = arith.extui %0 : i1 to i32
    %c0_i32_0 = arith.constant 0 : i32
    %2 = arith.cmpi ne, %1, %c0_i32_0 : i32
    scf.if %2 {
      %cst_86 = arith.constant 0.000000e+00 : f32
      %347 = vector.broadcast %cst_86 : f32 to vector<8x128xf32>
      %c0_87 = arith.constant 0 : index
      %c0_88 = arith.constant 0 : index
      %348 = vector.load %arg10[%c0_87, %c0_88] : memref<8x128xf32, #tpu.memory_space<vmem>>, vector<8x128xf32>
      tpu.vector_store %arg10[%c0_87, %c0_88], %347 {strides = array<i32>} : memref<8x128xf32, #tpu.memory_space<vmem>>, vector<8x128xf32>,
      %cst_89 = arith.constant 0.000000e+00 : f32
      %349 = vector.broadcast %cst_89 : f32 to vector<8x128xf32>
      %c0_90 = arith.constant 0 : index
      %c0_91 = arith.constant 0 : index
      %350 = vector.load %arg11[%c0_90, %c0_91] : memref<8x128xf32, #tpu.memory_space<vmem>>, vector<8x128xf32>
      tpu.vector_store %arg11[%c0_90, %c0_91], %349 {strides = array<i32>} : memref<8x128xf32, #tpu.memory_space<vmem>>, vector<8x128xf32>,
    } else {
    }
    %c0 = arith.constant 0 : index
    %c0_1 = arith.constant 0 : index
    %3 = vector.load %arg1[%c0, %c0_1] : memref<64x32xf32, #tpu.memory_space<vmem>>, vector<64x32xf32>
    %c0_2 = arith.constant 0 : index
    %c0_3 = arith.constant 0 : index
    %4 = vector.load %arg3[%c0_2, %c0_3] : memref<32x512xf32, #tpu.memory_space<vmem>>, vector<32x512xf32>
    %cst = arith.constant dense<0.000000e+00> : vector<64x512xf32>
    %5 = tpu.matmul %3, %4, %cst {dimension_numbers = #tpu.dot_dimension_numbers<[1], [0], [0], [1], [0, 0, 1, 1], [], []>} : vector<64x32xf32>, vector<32x512xf32>, vector<64x512xf32> -> vector<64x512xf32>
    %c0_4 = arith.constant 0 : index
    %c0_5 = arith.constant 0 : index
    %6 = vector.load %arg5[%c0_4, %c0_5] : memref<1x512xf32, #tpu.memory_space<vmem>>, vector<1x512xf32>
    %7 = vector.broadcast %6 : vector<1x512xf32> to vector<64x512xf32>
    %8 = arith.addf %5, %7 : vector<64x512xf32>
    %c0_6 = arith.constant 0 : index
    %c0_7 = arith.constant 0 : index
    %9 = vector.load %arg9[%c0_6, %c0_7] : memref<64x512xf32, #tpu.memory_space<vmem>>, vector<64x512xf32>
    tpu.vector_store %arg9[%c0_6, %c0_7], %8 {strides = array<i32>} : memref<64x512xf32, #tpu.memory_space<vmem>>, vector<64x512xf32>,
    %c0_8 = arith.constant 0 : index
    %c0_9 = arith.constant 0 : index
    %10 = vector.load %arg2[%c0_8, %c0_9] : memref<8x1xi32, #tpu.memory_space<vmem>>, vector<8x1xi32>
    %c8_i32 = arith.constant 8 : i32
    %11 = arith.muli %arg0, %c8_i32 : i32
    %c0_10 = arith.constant 0 : index
    %c0_11 = arith.constant 0 : index
    %12 = vector.load %arg10[%c0_10, %c0_11] : memref<8x128xf32, #tpu.memory_space<vmem>>, vector<8x128xf32>
    %c0_12 = arith.constant 0 : index
    %c0_13 = arith.constant 0 : index
    %13 = vector.load %arg11[%c0_12, %c0_13] : memref<8x128xf32, #tpu.memory_space<vmem>>, vector<8x128xf32>
    %c0_i32_14 = arith.constant 0 : i32
    %c8_i32_15 = arith.constant 8 : i32
    %14 = arith.muli %c0_i32_14, %c8_i32_15 : i32
    %15 = tpu.assume_multiple %14, 8 : i32
    %16 = arith.index_cast %15 : i32 to index
    %c0_16 = arith.constant 0 : index
    %17 = vector.load %arg9[%16, %c0_16] : memref<64x512xf32, #tpu.memory_space<vmem>>, vector<8x512xf32>
    %c0_17 = arith.constant 0 : index
    %c0_18 = arith.constant 0 : index
    %18 = vector.load %arg4[%c0_17, %c0_18] : memref<128x512xf32, #tpu.memory_space<vmem>>, vector<128x512xf32>
    %cst_19 = arith.constant dense<0.000000e+00> : vector<8x512xf32>
    %19 = tpu.matmul %12, %18, %cst_19 {dimension_numbers = #tpu.dot_dimension_numbers<[1], [0], [0], [1], [0, 0, 1, 1], [], []>} : vector<8x128xf32>, vector<128x512xf32>, vector<8x512xf32> -> vector<8x512xf32>
    %20 = arith.addf %17, %19 : vector<8x512xf32>
    %21 = vector.extract_strided_slice %20 {offsets = [0, 0], sizes = [8, 128], strides = [1, 1]} : vector<8x512xf32> to vector<8x128xf32>
    %22 = arith.negf %21 : vector<8x128xf32>
    %23 = math.exp %22 : vector<8x128xf32>
    %cst_20 = arith.constant 1.000000e+00 : f32
    %24 = vector.broadcast %cst_20 : f32 to vector<8x128xf32>
    %25 = arith.addf %24, %23 : vector<8x128xf32>
    %26 = arith.divf %24, %25 : vector<8x128xf32>
    %27 = vector.extract_strided_slice %20 {offsets = [0, 128], sizes = [8, 128], strides = [1, 1]} : vector<8x512xf32> to vector<8x128xf32>
    %28 = arith.negf %27 : vector<8x128xf32>
    %29 = math.exp %28 : vector<8x128xf32>
    %cst_21 = arith.constant 1.000000e+00 : f32
    %30 = vector.broadcast %cst_21 : f32 to vector<8x128xf32>
    %31 = arith.addf %30, %29 : vector<8x128xf32>
    %32 = arith.divf %30, %31 : vector<8x128xf32>
    %33 = vector.extract_strided_slice %20 {offsets = [0, 256], sizes = [8, 128], strides = [1, 1]} : vector<8x512xf32> to vector<8x128xf32>
    %34 = math.tanh %33 : vector<8x128xf32>
    %35 = vector.extract_strided_slice %20 {offsets = [0, 384], sizes = [8, 128], strides = [1, 1]} : vector<8x512xf32> to vector<8x128xf32>
    %36 = arith.negf %35 : vector<8x128xf32>
    %37 = math.exp %36 : vector<8x128xf32>
    %cst_22 = arith.constant 1.000000e+00 : f32
    %38 = vector.broadcast %cst_22 : f32 to vector<8x128xf32>
    %39 = arith.addf %38, %37 : vector<8x128xf32>
    %40 = arith.divf %38, %39 : vector<8x128xf32>
    %41 = arith.mulf %32, %13 : vector<8x128xf32>
    %42 = arith.mulf %26, %34 : vector<8x128xf32>
    %43 = arith.addf %41, %42 : vector<8x128xf32>
    %44 = math.tanh %43 : vector<8x128xf32>
    %45 = arith.mulf %40, %44 : vector<8x128xf32>
    %46 = arith.addi %11, %c0_i32_14 : i32
    %47 = vector.broadcast %46 : i32 to vector<8x1xi32>
    %48 = arith.cmpi slt, %47, %10 : vector<8x1xi32>
    %49 = vector.shape_cast %48 : vector<8x1xi1> to vector<8x1xi1>
    %50 = vector.broadcast %49 : vector<8x1xi1> to vector<8x128xi1>
    %51 = arith.select %50, %43, %13 : vector<8x128xi1>, vector<8x128xf32>
    %52 = vector.shape_cast %48 : vector<8x1xi1> to vector<8x1xi1>
    %53 = vector.broadcast %52 : vector<8x1xi1> to vector<8x128xi1>
    %54 = arith.select %53, %45, %12 : vector<8x128xi1>, vector<8x128xf32>
    %c1_i32 = arith.constant 1 : i32
    %c8_i32_23 = arith.constant 8 : i32
    %55 = arith.muli %c1_i32, %c8_i32_23 : i32
    %56 = tpu.assume_multiple %55, 8 : i32
    %57 = arith.index_cast %56 : i32 to index
    %c0_24 = arith.constant 0 : index
    %58 = vector.load %arg9[%57, %c0_24] : memref<64x512xf32, #tpu.memory_space<vmem>>, vector<8x512xf32>
    %c0_25 = arith.constant 0 : index
    %c0_26 = arith.constant 0 : index
    %59 = vector.load %arg4[%c0_25, %c0_26] : memref<128x512xf32, #tpu.memory_space<vmem>>, vector<128x512xf32>
    %cst_27 = arith.constant dense<0.000000e+00> : vector<8x512xf32>
    %60 = tpu.matmul %54, %59, %cst_27 {dimension_numbers = #tpu.dot_dimension_numbers<[1], [0], [0], [1], [0, 0, 1, 1], [], []>} : vector<8x128xf32>, vector<128x512xf32>, vector<8x512xf32> -> vector<8x512xf32>
    %61 = arith.addf %58, %60 : vector<8x512xf32>
    %62 = vector.extract_strided_slice %61 {offsets = [0, 0], sizes = [8, 128], strides = [1, 1]} : vector<8x512xf32> to vector<8x128xf32>
    %63 = arith.negf %62 : vector<8x128xf32>
    %64 = math.exp %63 : vector<8x128xf32>
    %cst_28 = arith.constant 1.000000e+00 : f32
    %65 = vector.broadcast %cst_28 : f32 to vector<8x128xf32>
    %66 = arith.addf %65, %64 : vector<8x128xf32>
    %67 = arith.divf %65, %66 : vector<8x128xf32>
    %68 = vector.extract_strided_slice %61 {offsets = [0, 128], sizes = [8, 128], strides = [1, 1]} : vector<8x512xf32> to vector<8x128xf32>
    %69 = arith.negf %68 : vector<8x128xf32>
    %70 = math.exp %69 : vector<8x128xf32>
    %cst_29 = arith.constant 1.000000e+00 : f32
    %71 = vector.broadcast %cst_29 : f32 to vector<8x128xf32>
    %72 = arith.addf %71, %70 : vector<8x128xf32>
    %73 = arith.divf %71, %72 : vector<8x128xf32>
    %74 = vector.extract_strided_slice %61 {offsets = [0, 256], sizes = [8, 128], strides = [1, 1]} : vector<8x512xf32> to vector<8x128xf32>
    %75 = math.tanh %74 : vector<8x128xf32>
    %76 = vector.extract_strided_slice %61 {offsets = [0, 384], sizes = [8, 128], strides = [1, 1]} : vector<8x512xf32> to vector<8x128xf32>
    %77 = arith.negf %76 : vector<8x128xf32>
    %78 = math.exp %77 : vector<8x128xf32>
    %cst_30 = arith.constant 1.000000e+00 : f32
    %79 = vector.broadcast %cst_30 : f32 to vector<8x128xf32>
    %80 = arith.addf %79, %78 : vector<8x128xf32>
    %81 = arith.divf %79, %80 : vector<8x128xf32>
    %82 = arith.mulf %73, %51 : vector<8x128xf32>
    %83 = arith.mulf %67, %75 : vector<8x128xf32>
    %84 = arith.addf %82, %83 : vector<8x128xf32>
    %85 = math.tanh %84 : vector<8x128xf32>
    %86 = arith.mulf %81, %85 : vector<8x128xf32>
    %87 = arith.addi %11, %c1_i32 : i32
    %88 = vector.broadcast %87 : i32 to vector<8x1xi32>
    %89 = arith.cmpi slt, %88, %10 : vector<8x1xi32>
    %90 = vector.shape_cast %89 : vector<8x1xi1> to vector<8x1xi1>
    %91 = vector.broadcast %90 : vector<8x1xi1> to vector<8x128xi1>
    %92 = arith.select %91, %84, %51 : vector<8x128xi1>, vector<8x128xf32>
    %93 = vector.shape_cast %89 : vector<8x1xi1> to vector<8x1xi1>
    %94 = vector.broadcast %93 : vector<8x1xi1> to vector<8x128xi1>
    %95 = arith.select %94, %86, %54 : vector<8x128xi1>, vector<8x128xf32>
    %c2_i32 = arith.constant 2 : i32
    %c8_i32_31 = arith.constant 8 : i32
    %96 = arith.muli %c2_i32, %c8_i32_31 : i32
    %97 = tpu.assume_multiple %96, 8 : i32
    %98 = arith.index_cast %97 : i32 to index
    %c0_32 = arith.constant 0 : index
    %99 = vector.load %arg9[%98, %c0_32] : memref<64x512xf32, #tpu.memory_space<vmem>>, vector<8x512xf32>
    %c0_33 = arith.constant 0 : index
    %c0_34 = arith.constant 0 : index
    %100 = vector.load %arg4[%c0_33, %c0_34] : memref<128x512xf32, #tpu.memory_space<vmem>>, vector<128x512xf32>
    %cst_35 = arith.constant dense<0.000000e+00> : vector<8x512xf32>
    %101 = tpu.matmul %95, %100, %cst_35 {dimension_numbers = #tpu.dot_dimension_numbers<[1], [0], [0], [1], [0, 0, 1, 1], [], []>} : vector<8x128xf32>, vector<128x512xf32>, vector<8x512xf32> -> vector<8x512xf32>
    %102 = arith.addf %99, %101 : vector<8x512xf32>
    %103 = vector.extract_strided_slice %102 {offsets = [0, 0], sizes = [8, 128], strides = [1, 1]} : vector<8x512xf32> to vector<8x128xf32>
    %104 = arith.negf %103 : vector<8x128xf32>
    %105 = math.exp %104 : vector<8x128xf32>
    %cst_36 = arith.constant 1.000000e+00 : f32
    %106 = vector.broadcast %cst_36 : f32 to vector<8x128xf32>
    %107 = arith.addf %106, %105 : vector<8x128xf32>
    %108 = arith.divf %106, %107 : vector<8x128xf32>
    %109 = vector.extract_strided_slice %102 {offsets = [0, 128], sizes = [8, 128], strides = [1, 1]} : vector<8x512xf32> to vector<8x128xf32>
    %110 = arith.negf %109 : vector<8x128xf32>
    %111 = math.exp %110 : vector<8x128xf32>
    %cst_37 = arith.constant 1.000000e+00 : f32
    %112 = vector.broadcast %cst_37 : f32 to vector<8x128xf32>
    %113 = arith.addf %112, %111 : vector<8x128xf32>
    %114 = arith.divf %112, %113 : vector<8x128xf32>
    %115 = vector.extract_strided_slice %102 {offsets = [0, 256], sizes = [8, 128], strides = [1, 1]} : vector<8x512xf32> to vector<8x128xf32>
    %116 = math.tanh %115 : vector<8x128xf32>
    %117 = vector.extract_strided_slice %102 {offsets = [0, 384], sizes = [8, 128], strides = [1, 1]} : vector<8x512xf32> to vector<8x128xf32>
    %118 = arith.negf %117 : vector<8x128xf32>
    %119 = math.exp %118 : vector<8x128xf32>
    %cst_38 = arith.constant 1.000000e+00 : f32
    %120 = vector.broadcast %cst_38 : f32 to vector<8x128xf32>
    %121 = arith.addf %120, %119 : vector<8x128xf32>
    %122 = arith.divf %120, %121 : vector<8x128xf32>
    %123 = arith.mulf %114, %92 : vector<8x128xf32>
    %124 = arith.mulf %108, %116 : vector<8x128xf32>
    %125 = arith.addf %123, %124 : vector<8x128xf32>
    %126 = math.tanh %125 : vector<8x128xf32>
    %127 = arith.mulf %122, %126 : vector<8x128xf32>
    %128 = arith.addi %11, %c2_i32 : i32
    %129 = vector.broadcast %128 : i32 to vector<8x1xi32>
    %130 = arith.cmpi slt, %129, %10 : vector<8x1xi32>
    %131 = vector.shape_cast %130 : vector<8x1xi1> to vector<8x1xi1>
    %132 = vector.broadcast %131 : vector<8x1xi1> to vector<8x128xi1>
    %133 = arith.select %132, %125, %92 : vector<8x128xi1>, vector<8x128xf32>
    %134 = vector.shape_cast %130 : vector<8x1xi1> to vector<8x1xi1>
    %135 = vector.broadcast %134 : vector<8x1xi1> to vector<8x128xi1>
    %136 = arith.select %135, %127, %95 : vector<8x128xi1>, vector<8x128xf32>
    %c3_i32 = arith.constant 3 : i32
    %c8_i32_39 = arith.constant 8 : i32
    %137 = arith.muli %c3_i32, %c8_i32_39 : i32
    %138 = tpu.assume_multiple %137, 8 : i32
    %139 = arith.index_cast %138 : i32 to index
    %c0_40 = arith.constant 0 : index
    %140 = vector.load %arg9[%139, %c0_40] : memref<64x512xf32, #tpu.memory_space<vmem>>, vector<8x512xf32>
    %c0_41 = arith.constant 0 : index
    %c0_42 = arith.constant 0 : index
    %141 = vector.load %arg4[%c0_41, %c0_42] : memref<128x512xf32, #tpu.memory_space<vmem>>, vector<128x512xf32>
    %cst_43 = arith.constant dense<0.000000e+00> : vector<8x512xf32>
    %142 = tpu.matmul %136, %141, %cst_43 {dimension_numbers = #tpu.dot_dimension_numbers<[1], [0], [0], [1], [0, 0, 1, 1], [], []>} : vector<8x128xf32>, vector<128x512xf32>, vector<8x512xf32> -> vector<8x512xf32>
    %143 = arith.addf %140, %142 : vector<8x512xf32>
    %144 = vector.extract_strided_slice %143 {offsets = [0, 0], sizes = [8, 128], strides = [1, 1]} : vector<8x512xf32> to vector<8x128xf32>
    %145 = arith.negf %144 : vector<8x128xf32>
    %146 = math.exp %145 : vector<8x128xf32>
    %cst_44 = arith.constant 1.000000e+00 : f32
    %147 = vector.broadcast %cst_44 : f32 to vector<8x128xf32>
    %148 = arith.addf %147, %146 : vector<8x128xf32>
    %149 = arith.divf %147, %148 : vector<8x128xf32>
    %150 = vector.extract_strided_slice %143 {offsets = [0, 128], sizes = [8, 128], strides = [1, 1]} : vector<8x512xf32> to vector<8x128xf32>
    %151 = arith.negf %150 : vector<8x128xf32>
    %152 = math.exp %151 : vector<8x128xf32>
    %cst_45 = arith.constant 1.000000e+00 : f32
    %153 = vector.broadcast %cst_45 : f32 to vector<8x128xf32>
    %154 = arith.addf %153, %152 : vector<8x128xf32>
    %155 = arith.divf %153, %154 : vector<8x128xf32>
    %156 = vector.extract_strided_slice %143 {offsets = [0, 256], sizes = [8, 128], strides = [1, 1]} : vector<8x512xf32> to vector<8x128xf32>
    %157 = math.tanh %156 : vector<8x128xf32>
    %158 = vector.extract_strided_slice %143 {offsets = [0, 384], sizes = [8, 128], strides = [1, 1]} : vector<8x512xf32> to vector<8x128xf32>
    %159 = arith.negf %158 : vector<8x128xf32>
    %160 = math.exp %159 : vector<8x128xf32>
    %cst_46 = arith.constant 1.000000e+00 : f32
    %161 = vector.broadcast %cst_46 : f32 to vector<8x128xf32>
    %162 = arith.addf %161, %160 : vector<8x128xf32>
    %163 = arith.divf %161, %162 : vector<8x128xf32>
    %164 = arith.mulf %155, %133 : vector<8x128xf32>
    %165 = arith.mulf %149, %157 : vector<8x128xf32>
    %166 = arith.addf %164, %165 : vector<8x128xf32>
    %167 = math.tanh %166 : vector<8x128xf32>
    %168 = arith.mulf %163, %167 : vector<8x128xf32>
    %169 = arith.addi %11, %c3_i32 : i32
    %170 = vector.broadcast %169 : i32 to vector<8x1xi32>
    %171 = arith.cmpi slt, %170, %10 : vector<8x1xi32>
    %172 = vector.shape_cast %171 : vector<8x1xi1> to vector<8x1xi1>
    %173 = vector.broadcast %172 : vector<8x1xi1> to vector<8x128xi1>
    %174 = arith.select %173, %166, %133 : vector<8x128xi1>, vector<8x128xf32>
    %175 = vector.shape_cast %171 : vector<8x1xi1> to vector<8x1xi1>
    %176 = vector.broadcast %175 : vector<8x1xi1> to vector<8x128xi1>
    %177 = arith.select %176, %168, %136 : vector<8x128xi1>, vector<8x128xf32>
    %c4_i32 = arith.constant 4 : i32
    %c8_i32_47 = arith.constant 8 : i32
    %178 = arith.muli %c4_i32, %c8_i32_47 : i32
    %179 = tpu.assume_multiple %178, 8 : i32
    %180 = arith.index_cast %179 : i32 to index
    %c0_48 = arith.constant 0 : index
    %181 = vector.load %arg9[%180, %c0_48] : memref<64x512xf32, #tpu.memory_space<vmem>>, vector<8x512xf32>
    %c0_49 = arith.constant 0 : index
    %c0_50 = arith.constant 0 : index
    %182 = vector.load %arg4[%c0_49, %c0_50] : memref<128x512xf32, #tpu.memory_space<vmem>>, vector<128x512xf32>
    %cst_51 = arith.constant dense<0.000000e+00> : vector<8x512xf32>
    %183 = tpu.matmul %177, %182, %cst_51 {dimension_numbers = #tpu.dot_dimension_numbers<[1], [0], [0], [1], [0, 0, 1, 1], [], []>} : vector<8x128xf32>, vector<128x512xf32>, vector<8x512xf32> -> vector<8x512xf32>
    %184 = arith.addf %181, %183 : vector<8x512xf32>
    %185 = vector.extract_strided_slice %184 {offsets = [0, 0], sizes = [8, 128], strides = [1, 1]} : vector<8x512xf32> to vector<8x128xf32>
    %186 = arith.negf %185 : vector<8x128xf32>
    %187 = math.exp %186 : vector<8x128xf32>
    %cst_52 = arith.constant 1.000000e+00 : f32
    %188 = vector.broadcast %cst_52 : f32 to vector<8x128xf32>
    %189 = arith.addf %188, %187 : vector<8x128xf32>
    %190 = arith.divf %188, %189 : vector<8x128xf32>
    %191 = vector.extract_strided_slice %184 {offsets = [0, 128], sizes = [8, 128], strides = [1, 1]} : vector<8x512xf32> to vector<8x128xf32>
    %192 = arith.negf %191 : vector<8x128xf32>
    %193 = math.exp %192 : vector<8x128xf32>
    %cst_53 = arith.constant 1.000000e+00 : f32
    %194 = vector.broadcast %cst_53 : f32 to vector<8x128xf32>
    %195 = arith.addf %194, %193 : vector<8x128xf32>
    %196 = arith.divf %194, %195 : vector<8x128xf32>
    %197 = vector.extract_strided_slice %184 {offsets = [0, 256], sizes = [8, 128], strides = [1, 1]} : vector<8x512xf32> to vector<8x128xf32>
    %198 = math.tanh %197 : vector<8x128xf32>
    %199 = vector.extract_strided_slice %184 {offsets = [0, 384], sizes = [8, 128], strides = [1, 1]} : vector<8x512xf32> to vector<8x128xf32>
    %200 = arith.negf %199 : vector<8x128xf32>
    %201 = math.exp %200 : vector<8x128xf32>
    %cst_54 = arith.constant 1.000000e+00 : f32
    %202 = vector.broadcast %cst_54 : f32 to vector<8x128xf32>
    %203 = arith.addf %202, %201 : vector<8x128xf32>
    %204 = arith.divf %202, %203 : vector<8x128xf32>
    %205 = arith.mulf %196, %174 : vector<8x128xf32>
    %206 = arith.mulf %190, %198 : vector<8x128xf32>
    %207 = arith.addf %205, %206 : vector<8x128xf32>
    %208 = math.tanh %207 : vector<8x128xf32>
    %209 = arith.mulf %204, %208 : vector<8x128xf32>
    %210 = arith.addi %11, %c4_i32 : i32
    %211 = vector.broadcast %210 : i32 to vector<8x1xi32>
    %212 = arith.cmpi slt, %211, %10 : vector<8x1xi32>
    %213 = vector.shape_cast %212 : vector<8x1xi1> to vector<8x1xi1>
    %214 = vector.broadcast %213 : vector<8x1xi1> to vector<8x128xi1>
    %215 = arith.select %214, %207, %174 : vector<8x128xi1>, vector<8x128xf32>
    %216 = vector.shape_cast %212 : vector<8x1xi1> to vector<8x1xi1>
    %217 = vector.broadcast %216 : vector<8x1xi1> to vector<8x128xi1>
    %218 = arith.select %217, %209, %177 : vector<8x128xi1>, vector<8x128xf32>
    %c5_i32 = arith.constant 5 : i32
    %c8_i32_55 = arith.constant 8 : i32
    %219 = arith.muli %c5_i32, %c8_i32_55 : i32
    %220 = tpu.assume_multiple %219, 8 : i32
    %221 = arith.index_cast %220 : i32 to index
    %c0_56 = arith.constant 0 : index
    %222 = vector.load %arg9[%221, %c0_56] : memref<64x512xf32, #tpu.memory_space<vmem>>, vector<8x512xf32>
    %c0_57 = arith.constant 0 : index
    %c0_58 = arith.constant 0 : index
    %223 = vector.load %arg4[%c0_57, %c0_58] : memref<128x512xf32, #tpu.memory_space<vmem>>, vector<128x512xf32>
    %cst_59 = arith.constant dense<0.000000e+00> : vector<8x512xf32>
    %224 = tpu.matmul %218, %223, %cst_59 {dimension_numbers = #tpu.dot_dimension_numbers<[1], [0], [0], [1], [0, 0, 1, 1], [], []>} : vector<8x128xf32>, vector<128x512xf32>, vector<8x512xf32> -> vector<8x512xf32>
    %225 = arith.addf %222, %224 : vector<8x512xf32>
    %226 = vector.extract_strided_slice %225 {offsets = [0, 0], sizes = [8, 128], strides = [1, 1]} : vector<8x512xf32> to vector<8x128xf32>
    %227 = arith.negf %226 : vector<8x128xf32>
    %228 = math.exp %227 : vector<8x128xf32>
    %cst_60 = arith.constant 1.000000e+00 : f32
    %229 = vector.broadcast %cst_60 : f32 to vector<8x128xf32>
    %230 = arith.addf %229, %228 : vector<8x128xf32>
    %231 = arith.divf %229, %230 : vector<8x128xf32>
    %232 = vector.extract_strided_slice %225 {offsets = [0, 128], sizes = [8, 128], strides = [1, 1]} : vector<8x512xf32> to vector<8x128xf32>
    %233 = arith.negf %232 : vector<8x128xf32>
    %234 = math.exp %233 : vector<8x128xf32>
    %cst_61 = arith.constant 1.000000e+00 : f32
    %235 = vector.broadcast %cst_61 : f32 to vector<8x128xf32>
    %236 = arith.addf %235, %234 : vector<8x128xf32>
    %237 = arith.divf %235, %236 : vector<8x128xf32>
    %238 = vector.extract_strided_slice %225 {offsets = [0, 256], sizes = [8, 128], strides = [1, 1]} : vector<8x512xf32> to vector<8x128xf32>
    %239 = math.tanh %238 : vector<8x128xf32>
    %240 = vector.extract_strided_slice %225 {offsets = [0, 384], sizes = [8, 128], strides = [1, 1]} : vector<8x512xf32> to vector<8x128xf32>
    %241 = arith.negf %240 : vector<8x128xf32>
    %242 = math.exp %241 : vector<8x128xf32>
    %cst_62 = arith.constant 1.000000e+00 : f32
    %243 = vector.broadcast %cst_62 : f32 to vector<8x128xf32>
    %244 = arith.addf %243, %242 : vector<8x128xf32>
    %245 = arith.divf %243, %244 : vector<8x128xf32>
    %246 = arith.mulf %237, %215 : vector<8x128xf32>
    %247 = arith.mulf %231, %239 : vector<8x128xf32>
    %248 = arith.addf %246, %247 : vector<8x128xf32>
    %249 = math.tanh %248 : vector<8x128xf32>
    %250 = arith.mulf %245, %249 : vector<8x128xf32>
    %251 = arith.addi %11, %c5_i32 : i32
    %252 = vector.broadcast %251 : i32 to vector<8x1xi32>
    %253 = arith.cmpi slt, %252, %10 : vector<8x1xi32>
    %254 = vector.shape_cast %253 : vector<8x1xi1> to vector<8x1xi1>
    %255 = vector.broadcast %254 : vector<8x1xi1> to vector<8x128xi1>
    %256 = arith.select %255, %248, %215 : vector<8x128xi1>, vector<8x128xf32>
    %257 = vector.shape_cast %253 : vector<8x1xi1> to vector<8x1xi1>
    %258 = vector.broadcast %257 : vector<8x1xi1> to vector<8x128xi1>
    %259 = arith.select %258, %250, %218 : vector<8x128xi1>, vector<8x128xf32>
    %c6_i32 = arith.constant 6 : i32
    %c8_i32_63 = arith.constant 8 : i32
    %260 = arith.muli %c6_i32, %c8_i32_63 : i32
    %261 = tpu.assume_multiple %260, 8 : i32
    %262 = arith.index_cast %261 : i32 to index
    %c0_64 = arith.constant 0 : index
    %263 = vector.load %arg9[%262, %c0_64] : memref<64x512xf32, #tpu.memory_space<vmem>>, vector<8x512xf32>
    %c0_65 = arith.constant 0 : index
    %c0_66 = arith.constant 0 : index
    %264 = vector.load %arg4[%c0_65, %c0_66] : memref<128x512xf32, #tpu.memory_space<vmem>>, vector<128x512xf32>
    %cst_67 = arith.constant dense<0.000000e+00> : vector<8x512xf32>
    %265 = tpu.matmul %259, %264, %cst_67 {dimension_numbers = #tpu.dot_dimension_numbers<[1], [0], [0], [1], [0, 0, 1, 1], [], []>} : vector<8x128xf32>, vector<128x512xf32>, vector<8x512xf32> -> vector<8x512xf32>
    %266 = arith.addf %263, %265 : vector<8x512xf32>
    %267 = vector.extract_strided_slice %266 {offsets = [0, 0], sizes = [8, 128], strides = [1, 1]} : vector<8x512xf32> to vector<8x128xf32>
    %268 = arith.negf %267 : vector<8x128xf32>
    %269 = math.exp %268 : vector<8x128xf32>
    %cst_68 = arith.constant 1.000000e+00 : f32
    %270 = vector.broadcast %cst_68 : f32 to vector<8x128xf32>
    %271 = arith.addf %270, %269 : vector<8x128xf32>
    %272 = arith.divf %270, %271 : vector<8x128xf32>
    %273 = vector.extract_strided_slice %266 {offsets = [0, 128], sizes = [8, 128], strides = [1, 1]} : vector<8x512xf32> to vector<8x128xf32>
    %274 = arith.negf %273 : vector<8x128xf32>
    %275 = math.exp %274 : vector<8x128xf32>
    %cst_69 = arith.constant 1.000000e+00 : f32
    %276 = vector.broadcast %cst_69 : f32 to vector<8x128xf32>
    %277 = arith.addf %276, %275 : vector<8x128xf32>
    %278 = arith.divf %276, %277 : vector<8x128xf32>
    %279 = vector.extract_strided_slice %266 {offsets = [0, 256], sizes = [8, 128], strides = [1, 1]} : vector<8x512xf32> to vector<8x128xf32>
    %280 = math.tanh %279 : vector<8x128xf32>
    %281 = vector.extract_strided_slice %266 {offsets = [0, 384], sizes = [8, 128], strides = [1, 1]} : vector<8x512xf32> to vector<8x128xf32>
    %282 = arith.negf %281 : vector<8x128xf32>
    %283 = math.exp %282 : vector<8x128xf32>
    %cst_70 = arith.constant 1.000000e+00 : f32
    %284 = vector.broadcast %cst_70 : f32 to vector<8x128xf32>
    %285 = arith.addf %284, %283 : vector<8x128xf32>
    %286 = arith.divf %284, %285 : vector<8x128xf32>
    %287 = arith.mulf %278, %256 : vector<8x128xf32>
    %288 = arith.mulf %272, %280 : vector<8x128xf32>
    %289 = arith.addf %287, %288 : vector<8x128xf32>
    %290 = math.tanh %289 : vector<8x128xf32>
    %291 = arith.mulf %286, %290 : vector<8x128xf32>
    %292 = arith.addi %11, %c6_i32 : i32
    %293 = vector.broadcast %292 : i32 to vector<8x1xi32>
    %294 = arith.cmpi slt, %293, %10 : vector<8x1xi32>
    %295 = vector.shape_cast %294 : vector<8x1xi1> to vector<8x1xi1>
    %296 = vector.broadcast %295 : vector<8x1xi1> to vector<8x128xi1>
    %297 = arith.select %296, %289, %256 : vector<8x128xi1>, vector<8x128xf32>
    %298 = vector.shape_cast %294 : vector<8x1xi1> to vector<8x1xi1>
    %299 = vector.broadcast %298 : vector<8x1xi1> to vector<8x128xi1>
    %300 = arith.select %299, %291, %259 : vector<8x128xi1>, vector<8x128xf32>
    %c7_i32 = arith.constant 7 : i32
    %c8_i32_71 = arith.constant 8 : i32
    %301 = arith.muli %c7_i32, %c8_i32_71 : i32
    %302 = tpu.assume_multiple %301, 8 : i32
    %303 = arith.index_cast %302 : i32 to index
    %c0_72 = arith.constant 0 : index
    %304 = vector.load %arg9[%303, %c0_72] : memref<64x512xf32, #tpu.memory_space<vmem>>, vector<8x512xf32>
    %c0_73 = arith.constant 0 : index
    %c0_74 = arith.constant 0 : index
    %305 = vector.load %arg4[%c0_73, %c0_74] : memref<128x512xf32, #tpu.memory_space<vmem>>, vector<128x512xf32>
    %cst_75 = arith.constant dense<0.000000e+00> : vector<8x512xf32>
    %306 = tpu.matmul %300, %305, %cst_75 {dimension_numbers = #tpu.dot_dimension_numbers<[1], [0], [0], [1], [0, 0, 1, 1], [], []>} : vector<8x128xf32>, vector<128x512xf32>, vector<8x512xf32> -> vector<8x512xf32>
    %307 = arith.addf %304, %306 : vector<8x512xf32>
    %308 = vector.extract_strided_slice %307 {offsets = [0, 0], sizes = [8, 128], strides = [1, 1]} : vector<8x512xf32> to vector<8x128xf32>
    %309 = arith.negf %308 : vector<8x128xf32>
    %310 = math.exp %309 : vector<8x128xf32>
    %cst_76 = arith.constant 1.000000e+00 : f32
    %311 = vector.broadcast %cst_76 : f32 to vector<8x128xf32>
    %312 = arith.addf %311, %310 : vector<8x128xf32>
    %313 = arith.divf %311, %312 : vector<8x128xf32>
    %314 = vector.extract_strided_slice %307 {offsets = [0, 128], sizes = [8, 128], strides = [1, 1]} : vector<8x512xf32> to vector<8x128xf32>
    %315 = arith.negf %314 : vector<8x128xf32>
    %316 = math.exp %315 : vector<8x128xf32>
    %cst_77 = arith.constant 1.000000e+00 : f32
    %317 = vector.broadcast %cst_77 : f32 to vector<8x128xf32>
    %318 = arith.addf %317, %316 : vector<8x128xf32>
    %319 = arith.divf %317, %318 : vector<8x128xf32>
    %320 = vector.extract_strided_slice %307 {offsets = [0, 256], sizes = [8, 128], strides = [1, 1]} : vector<8x512xf32> to vector<8x128xf32>
    %321 = math.tanh %320 : vector<8x128xf32>
    %322 = vector.extract_strided_slice %307 {offsets = [0, 384], sizes = [8, 128], strides = [1, 1]} : vector<8x512xf32> to vector<8x128xf32>
    %323 = arith.negf %322 : vector<8x128xf32>
    %324 = math.exp %323 : vector<8x128xf32>
    %cst_78 = arith.constant 1.000000e+00 : f32
    %325 = vector.broadcast %cst_78 : f32 to vector<8x128xf32>
    %326 = arith.addf %325, %324 : vector<8x128xf32>
    %327 = arith.divf %325, %326 : vector<8x128xf32>
    %328 = arith.mulf %319, %297 : vector<8x128xf32>
    %329 = arith.mulf %313, %321 : vector<8x128xf32>
    %330 = arith.addf %328, %329 : vector<8x128xf32>
    %331 = math.tanh %330 : vector<8x128xf32>
    %332 = arith.mulf %327, %331 : vector<8x128xf32>
    %333 = arith.addi %11, %c7_i32 : i32
    %334 = vector.broadcast %333 : i32 to vector<8x1xi32>
    %335 = arith.cmpi slt, %334, %10 : vector<8x1xi32>
    %336 = vector.shape_cast %335 : vector<8x1xi1> to vector<8x1xi1>
    %337 = vector.broadcast %336 : vector<8x1xi1> to vector<8x128xi1>
    %338 = arith.select %337, %330, %297 : vector<8x128xi1>, vector<8x128xf32>
    %339 = vector.shape_cast %335 : vector<8x1xi1> to vector<8x1xi1>
    %340 = vector.broadcast %339 : vector<8x1xi1> to vector<8x128xi1>
    %341 = arith.select %340, %332, %300 : vector<8x128xi1>, vector<8x128xf32>
    %c8_i32_79 = arith.constant 8 : i32
    %c0_80 = arith.constant 0 : index
    %c0_81 = arith.constant 0 : index
    %342 = vector.load %arg10[%c0_80, %c0_81] : memref<8x128xf32, #tpu.memory_space<vmem>>, vector<8x128xf32>
    tpu.vector_store %arg10[%c0_80, %c0_81], %341 {strides = array<i32>} : memref<8x128xf32, #tpu.memory_space<vmem>>, vector<8x128xf32>,
    %c0_82 = arith.constant 0 : index
    %c0_83 = arith.constant 0 : index
    %343 = vector.load %arg11[%c0_82, %c0_83] : memref<8x128xf32, #tpu.memory_space<vmem>>, vector<8x128xf32>
    tpu.vector_store %arg11[%c0_82, %c0_83], %338 {strides = array<i32>} : memref<8x128xf32, #tpu.memory_space<vmem>>, vector<8x128xf32>,
    %c0_i32_84 = arith.constant 0 : i32
    %344 = arith.cmpi eq, %arg0, %c0_i32_84 : i32
    %345 = arith.extui %344 : i1 to i32
    %c0_i32_85 = arith.constant 0 : i32
    %346 = arith.cmpi ne, %345, %c0_i32_85 : i32
    scf.if %346 {
      %c0_86 = arith.constant 0 : index
      %c0_87 = arith.constant 0 : index
      %347 = vector.load %arg6[%c0_86, %c0_87] : memref<128x128xf32, #tpu.memory_space<vmem>>, vector<128x128xf32>
      %cst_88 = arith.constant dense<0.000000e+00> : vector<8x128xf32>
      %348 = tpu.matmul %341, %347, %cst_88 {dimension_numbers = #tpu.dot_dimension_numbers<[1], [0], [0], [1], [0, 0, 1, 1], [], []>} : vector<8x128xf32>, vector<128x128xf32>, vector<8x128xf32> -> vector<8x128xf32>
      %c0_89 = arith.constant 0 : index
      %c0_90 = arith.constant 0 : index
      %349 = vector.load %arg7[%c0_89, %c0_90] : memref<1x128xf32, #tpu.memory_space<vmem>>, vector<1x128xf32>
      %350 = vector.broadcast %349 : vector<1x128xf32> to vector<8x128xf32>
      %351 = arith.addf %348, %350 : vector<8x128xf32>
      %c0_91 = arith.constant 0 : index
      %c0_92 = arith.constant 0 : index
      %352 = vector.load %arg8[%c0_91, %c0_92] : memref<8x128xf32, #tpu.memory_space<vmem>>, vector<8x128xf32>
      tpu.vector_store %arg8[%c0_91, %c0_92], %351 {strides = array<i32>} : memref<8x128xf32, #tpu.memory_space<vmem>>, vector<8x128xf32>,
    } else {
    }
    return
  }
  func.func @transform_0(%arg0: i32) -> (i32, i32) {
    %c0_i32 = arith.constant 0 : i32
    %c0_i32_0 = arith.constant 0 : i32
    return %arg0, %c0_i32 : i32, i32
  }
  func.func @transform_1(%arg0: i32) -> (i32, i32) {
    %c0_i32 = arith.constant 0 : i32
    %c0_i32_0 = arith.constant 0 : i32
    %c0_i32_1 = arith.constant 0 : i32
    return %c0_i32, %c0_i32_0 : i32, i32
  }
  func.func @transform_2(%arg0: i32) -> (i32, i32) {
    %c0_i32 = arith.constant 0 : i32
    %c0_i32_0 = arith.constant 0 : i32
    %c0_i32_1 = arith.constant 0 : i32
    return %c0_i32, %c0_i32_0 : i32, i32
  }
  func.func @transform_3(%arg0: i32) -> (i32, i32) {
    %c0_i32 = arith.constant 0 : i32
    %c0_i32_0 = arith.constant 0 : i32
    %c0_i32_1 = arith.constant 0 : i32
    return %c0_i32, %c0_i32_0 : i32, i32
  }
  func.func @transform_4(%arg0: i32) -> (i32, i32) {
    %c0_i32 = arith.constant 0 : i32
    %c0_i32_0 = arith.constant 0 : i32
    %c0_i32_1 = arith.constant 0 : i32
    return %c0_i32, %c0_i32_0 : i32, i32
  }
  func.func @transform_5(%arg0: i32) -> (i32, i32) {
    %c0_i32 = arith.constant 0 : i32
    %c0_i32_0 = arith.constant 0 : i32
    %c0_i32_1 = arith.constant 0 : i32
    return %c0_i32, %c0_i32_0 : i32, i32
  }
  func.func @transform_6(%arg0: i32) -> (i32, i32) {
    %c0_i32 = arith.constant 0 : i32
    %c0_i32_0 = arith.constant 0 : i32
    %c0_i32_1 = arith.constant 0 : i32
    return %c0_i32, %c0_i32_0 : i32, i32
  }
  func.func @transform_7(%arg0: i32) -> (i32, i32) {
    %c0_i32 = arith.constant 0 : i32
    %c0_i32_0 = arith.constant 0 : i32
    %c0_i32_1 = arith.constant 0 : i32
    return %c0_i32, %c0_i32_0 : i32, i32
  }
}

</mosaic_0001>

<llo_original>
// kernel: tpu_custom_call.1
$region0: #{tpu_custom_call.1}
  #allocation0 [shape = 'u32[]', space=smem, size = 0x4, offset = 0x4, fixed_abs, tag = 'smem constant byte address 0x4 - core index']
  #allocation1 [shape = 'u32[144,128]{1,0:T(1,128)}', space=vmem, size = 0x12000, scoped, tag = 'internal scratch']
  #allocation2 [shape = 'f32[64,512]{1,0:T(8,128)}', space=vmem, size = 0x20000, scoped, tag = 'scratch operand']
  #allocation3 [shape = 'f32[8,128]{1,0:T(8,128)}', space=vmem, size = 0x1000, scoped, tag = 'scratch operand']
  #allocation4 [shape = 'f32[8,128]{1,0:T(8,128)}', space=vmem, size = 0x1000, scoped, tag = 'scratch operand']
  %s0 = inlined_call_operand.vmem [shape: f32[64,32], index: 0, kind: input, shape index: {}]
  %s1 = inlined_call_operand.vmem [shape: s32[8,1], index: 1, kind: input, shape index: {}]
  %s2 = inlined_call_operand.hbm [shape: f32[32,512], index: 2, kind: input, shape index: {}]
  %s3 = inlined_call_operand.hbm [shape: f32[128,512], index: 3, kind: input, shape index: {}]
  %s4 = inlined_call_operand.vmem [shape: f32[1,512], index: 4, kind: input, shape index: {}]
  %s5 = inlined_call_operand.hbm [shape: f32[128,128], index: 5, kind: input, shape index: {}]
  %s6 = inlined_call_operand.vmem [shape: f32[1,128], index: 6, kind: input, shape index: {}]
  %s7 = inlined_call_operand.hbm [shape: f32[8,128], index: 7, kind: output, shape index: {}]
  %s8 = sld [smem:[#allocation0]]
  $region58: #{tpu_custom_call.1} parent=0
    _
  %s10 = ssub.s32 1, %s8
  %s11 = scalar_select 0, %s10, %s8
  $region1: #{tpu_custom_call.1} parent=0
    #allocation5 [shape = 'u8[65536]{0}', space=vmem, size = 0x10000, scoped, tag = 'input window, operand 2, single buffered']
    #allocation6 [shape = 's32[1]{0}', space=sflag, size = 0x4, scoped, tag = 'scoped memory for tpu_custom_call.1']
    #allocation7 [shape = 's32[1]{0}', space=sflag, size = 0x4, scoped, tag = 'scoped memory for tpu_custom_call.1']
    #allocation8 [shape = 'u8[262144]{0}', space=vmem, size = 0x40000, scoped, tag = 'input window, operand 3, single buffered']
    #allocation9 [shape = 's32[1]{0}', space=sflag, size = 0x4, scoped, tag = 'scoped memory for tpu_custom_call.1']
    #allocation10 [shape = 'u8[65536]{0}', space=vmem, size = 0x10000, scoped, tag = 'input window, operand 5, single buffered']
    #allocation11 [shape = 'u8[4096]{0}', space=vmem, size = 0x1000, scoped, tag = 'output window, operand 0, single buffered']
    %12 = vsyncpa [#allocation6], 0
    %13 = vsyncpa [#allocation9], 0
    %14 = vsyncpa [#allocation7], 0
    // Predicated region
    $region2: #{tpu_custom_call.1} parent=1 // pred_check
      _
    $region3: #{tpu_custom_call.1} parent=1 // pred_check_branch
      %16 = sbr.rel (0) target = $region5
    $region4: #{tpu_custom_call.1} parent=1 // pred_region
      _
    $region5: #{tpu_custom_call.1} parent=1 // pred_fallthru
      _
    // Predicated region
    $region6: #{tpu_custom_call.1} parent=1 // pred_check
      _
    $region7: #{tpu_custom_call.1} parent=1 // pred_check_branch
      %18 = sbr.rel (0) target = $region9
    $region8: #{tpu_custom_call.1} parent=1 // pred_region
      _
    $region9: #{tpu_custom_call.1} parent=1 // pred_fallthru
      _
    // Predicated region
    $region10: #{tpu_custom_call.1} parent=1 // pred_check
      _
    $region11: #{tpu_custom_call.1} parent=1 // pred_check_branch
      %20 = sbr.rel (0) target = $region13
    $region12: #{tpu_custom_call.1} parent=1 // pred_region
      %s22 = ssub.s32 2048, 2048
      %23 = vsyncadd [#allocation6], %s22
      %s24 = sshll.u32 [#allocation5], 4
      %s25 = int_to_ptr.vmem [resolvable:$true] %s24
      %30 = dma.hbm_to_vmem [thread:$0]  %s2, 2048, %s25, [#allocation6], 512, 512, 32
    $region13: #{tpu_custom_call.1} parent=1 // pred_fallthru
      _
    // Predicated region
    $region14: #{tpu_custom_call.1} parent=1 // pred_check
      _
    $region15: #{tpu_custom_call.1} parent=1 // pred_check_branch
      %32 = sbr.rel (0) target = $region17
    $region16: #{tpu_custom_call.1} parent=1 // pred_region
      %s34 = ssub.s32 8192, 8192
      %35 = vsyncadd [#allocation9], %s34
      %s36 = sshll.u32 [#allocation8], 4
      %s37 = int_to_ptr.vmem [resolvable:$true] %s36
      %42 = dma.hbm_to_vmem [thread:$0]  %s3, 8192, %s37, [#allocation9], 512, 512, 32
    $region17: #{tpu_custom_call.1} parent=1 // pred_fallthru
      _
    // Predicated region
    $region18: #{tpu_custom_call.1} parent=1 // pred_check
      _
    $region19: #{tpu_custom_call.1} parent=1 // pred_check_branch
      %44 = sbr.rel (0) target = $region21
    $region20: #{tpu_custom_call.1} parent=1 // pred_region
      _
    $region21: #{tpu_custom_call.1} parent=1 // pred_fallthru
      _
    // Predicated region
    $region22: #{tpu_custom_call.1} parent=1 // pred_check
      _
    $region23: #{tpu_custom_call.1} parent=1 // pred_check_branch
      %46 = sbr.rel (0) target = $region25
    $region24: #{tpu_custom_call.1} parent=1 // pred_region
      %s48 = ssub.s32 2048, 2048
      %49 = vsyncadd [#allocation9], %s48
      %s50 = sshll.u32 [#allocation10], 4
      %s51 = int_to_ptr.vmem [resolvable:$true] %s50
      %56 = dma.hbm_to_vmem [thread:$0]  %s5, 2048, %s51, [#allocation9], 128, 128, 8
    $region25: #{tpu_custom_call.1} parent=1 // pred_fallthru
      _
    // Predicated region
    $region26: #{tpu_custom_call.1} parent=1 // pred_check
      _
    $region27: #{tpu_custom_call.1} parent=1 // pred_check_branch
      %58 = sbr.rel (0) target = $region29
    $region28: #{tpu_custom_call.1} parent=1 // pred_region
      _
    $region29: #{tpu_custom_call.1} parent=1 // pred_fallthru
      _
    // Predicated region
    $region30: #{tpu_custom_call.1} parent=1 // pred_check
      _
    $region31: #{tpu_custom_call.1} parent=1 // pred_check_branch
      %60 = sbr.rel (0) target = $region33
    $region32: #{tpu_custom_call.1} parent=1 // pred_region
      %61 = dma.done [#allocation6], 2048
    $region33: #{tpu_custom_call.1} parent=1 // pred_fallthru
      _
    // Predicated region
    $region34: #{tpu_custom_call.1} parent=1 // pred_check
      _
    $region35: #{tpu_custom_call.1} parent=1 // pred_check_branch
      %63 = sbr.rel (0) target = $region37
    $region36: #{tpu_custom_call.1} parent=1 // pred_region
      %64 = dma.done [#allocation9], 8192
    $region37: #{tpu_custom_call.1} parent=1 // pred_fallthru
      _
    // Predicated region
    $region38: #{tpu_custom_call.1} parent=1 // pred_check
      _
    $region39: #{tpu_custom_call.1} parent=1 // pred_check_branch
      %66 = sbr.rel (0) target = $region41
    $region40: #{tpu_custom_call.1} parent=1 // pred_region
      %67 = dma.done [#allocation9], 2048
    $region41: #{tpu_custom_call.1} parent=1 // pred_fallthru
      _
    %p68 = scmp.eq.s32.totalorder 0, 0
    // Predicated region
    $region42: #{tpu_custom_call.1} parent=1 // pred_check
      %p69 = pneg %p68
    $region43: #{tpu_custom_call.1} parent=1 // pred_check_branch
      %71 = sbr.rel (%p69) target = $region45
    $region44: #{tpu_custom_call.1} parent=1 // pred_region
      %72 = vst [vmem:[#allocation3] sm:$0xff] 0.0
      %73 = vst [vmem:[#allocation4] sm:$0xff] 0.0
    $region45: #{tpu_custom_call.1} parent=1 // pred_fallthru
      _
    %v74 = vld [vmem:[%s0] sm:$0xff]
    %v75 = vld [vmem:[%s0 + $0x8] sm:$0xff]
    %v76 = vld [vmem:[%s0 + $0x10] sm:$0xff]
    %v77 = vld [vmem:[%s0 + $0x18] sm:$0xff]
    %v78 = vld [vmem:[%s0 + $0x20] sm:$0xff]
    %v79 = vld [vmem:[%s0 + $0x28] sm:$0xff]
    %v80 = vld [vmem:[%s0 + $0x30] sm:$0xff]
    %v81 = vld [vmem:[%s0 + $0x38] sm:$0xff]
    %v82 = vld [vmem:[#allocation5] sm:$0xff]
    %v83 = vld [vmem:[#allocation5 + $0x8] sm:$0xff]
    %v84 = vld [vmem:[#allocation5 + $0x10] sm:$0xff]
    %v85 = vld [vmem:[#allocation5 + $0x18] sm:$0xff]
    %v86 = vld [vmem:[#allocation5 + $0x20] sm:$0xff]
    %v87 = vld [vmem:[#allocation5 + $0x28] sm:$0xff]
    %v88 = vld [vmem:[#allocation5 + $0x30] sm:$0xff]
    %v89 = vld [vmem:[#allocation5 + $0x38] sm:$0xff]
    %v90 = vld [vmem:[#allocation5 + $0x40] sm:$0xff]
    %v91 = vld [vmem:[#allocation5 + $0x48] sm:$0xff]
    %v92 = vld [vmem:[#allocation5 + $0x50] sm:$0xff]
    %v93 = vld [vmem:[#allocation5 + $0x58] sm:$0xff]
    %v94 = vld [vmem:[#allocation5 + $0x60] sm:$0xff]
    %v95 = vld [vmem:[#allocation5 + $0x68] sm:$0xff]
    %v96 = vld [vmem:[#allocation5 + $0x70] sm:$0xff]
    %v97 = vld [vmem:[#allocation5 + $0x78] sm:$0xff]
    %v98 = vld [vmem:[%s4] sm:$0xf]
    %v100 = vlaneseq
    %v101 = vshrl.u32 %v100, 7
    %v102 = vsub.s32 0, %v101
    %v103 = vrot.slane %v98, %v102
    %v104 = vlaneseq
    %v105 = vshrl.u32 %v104, 7
    %v106 = vsub.s32 1, %v105
    %v107 = vrot.slane %v98, %v106
    %v108 = vlaneseq
    %v109 = vshrl.u32 %v108, 7
    %v110 = vsub.s32 2, %v109
    %v111 = vrot.slane %v98, %v110
    %v112 = vlaneseq
    %v113 = vshrl.u32 %v112, 7
    %v114 = vsub.s32 3, %v113
    %v115 = vrot.slane %v98, %v114
    %vm120 = vcmask 261120
    %v122 = vsel %vm120, %v74, 0
    %v125 = vsel %vm120, %v75, 0
    %v128 = vsel %vm120, %v76, 0
    %v131 = vsel %vm120, %v77, 0
    %v134 = vsel %vm120, %v78, 0
    %v137 = vsel %vm120, %v79, 0
    %v140 = vsel %vm120, %v80, 0
    %v143 = vsel %vm120, %v81, 0
    %145 = vmatprep.subr.mxu0 %v83
    %146 = vmatpush1.msra.mxu0 %v82
    %147 = vmatprep.subr.mxu0 %v87
    %148 = vmatpush1.msra.mxu0 %v86
    %149 = vmatprep.subr.mxu0 %v91
    %150 = vmatpush1.msra.mxu0 %v90
    %151 = vmatprep.subr.mxu0 %v95
    %152 = vmatpush1.msra.mxu0 %v94
    %153 = vmatprep.subr.mxu0 0.0
    %154 = vmatpush1.msra.mxu0 0.0
    %155 = vmatprep.subr.mxu0 0.0
    %156 = vmatpush1.msra.mxu0 0.0
    %157 = vmatprep.subr.mxu0 0.0
    %158 = vmatpush1.msra.mxu0 0.0
    %159 = vmatprep.subr.mxu0 0.0
    %160 = vmatpush1.msra.mxu0 0.0
    %161 = vmatprep.subr.mxu0 0.0
    %162 = vmatpush1.msra.mxu0 0.0
    %163 = vmatprep.subr.mxu0 0.0
    %164 = vmatpush1.msra.mxu0 0.0
    %165 = vmatprep.subr.mxu0 0.0
    %166 = vmatpush1.msra.mxu0 0.0
    %167 = vmatprep.subr.mxu0 0.0
    %168 = vmatpush1.msra.mxu0 0.0
    %169 = vmatprep.subr.mxu0 0.0
    %170 = vmatpush1.msra.mxu0 0.0
    %171 = vmatprep.subr.mxu0 0.0
    %172 = vmatpush1.msra.mxu0 0.0
    %173 = vmatprep.subr.mxu0 0.0
    %174 = vmatpush1.msra.mxu0 0.0
    %175 = vmatprep.subr.mxu0 0.0
    %176 = vmatpush1.msra.mxu0 0.0
    %177 = vmatprep.subr.mxu0 0.0
    %178 = vmatpush1.msra.mxu0 0.0
    %179 = vmatprep.subr.mxu0 0.0
    %180 = vmatpush1.msra.mxu0 0.0
    %181 = vmatprep.subr.mxu0 0.0
    %182 = vmatpush1.msra.mxu0 0.0
    %183 = vmatprep.subr.mxu0 0.0
    %184 = vmatpush1.msra.mxu0 0.0
    %185 = vmatprep.subr.mxu0 0.0
    %186 = vmatpush1.msra.mxu0 0.0
    %187 = vmatprep.subr.mxu0 0.0
    %188 = vmatpush1.msra.mxu0 0.0
    %189 = vmatprep.subr.mxu0 0.0
    %190 = vmatpush1.msra.mxu0 0.0
    %191 = vmatprep.subr.mxu0 0.0
    %192 = vmatpush1.msra.mxu0 0.0
    %193 = vmatprep.subr.mxu0 0.0
    %194 = vmatpush1.msra.mxu0 0.0
    %195 = vmatprep.subr.mxu0 0.0
    %196 = vmatpush1.msra.mxu0 0.0
    %197 = vmatprep.subr.mxu0 0.0
    %198 = vmatpush1.msra.mxu0 0.0
    %199 = vmatprep.subr.mxu0 0.0
    %200 = vmatpush1.msra.mxu0 0.0
    %201 = vmatprep.subr.mxu0 0.0
    %202 = vmatpush1.msra.mxu0 0.0
    %203 = vmatprep.subr.mxu0 0.0
    %204 = vmatpush1.msra.mxu0 0.0
    %205 = vmatprep.subr.mxu0 0.0
    %206 = vmatpush1.msra.mxu0 0.0
    %207 = vmatprep.subr.mxu0 0.0
    %208 = vmatpush1.msra.mxu0 0.0
    %209 = vmatprep.mubr.f32.mxu0 0.0
    %210 = vmatmul.mubr.f32.gmra.mrb[0].mxu0 %v122
    %v211 = vpop.f32.mrb[0].mxu0
    %v212 = vadd.f32 %v103, %v211
    %v213 = vpop.f32.mrb[0].mxu0
    %v214 = vadd.f32 %v107, %v213
    %215 = vmatprep.mubr.f32.mxu0 0.0
    %216 = vmatmul.mubr.f32.gmra.mrb[0].mxu0 %v125
    %v217 = vpop.f32.mrb[0].mxu0
    %v218 = vadd.f32 %v103, %v217
    %v219 = vpop.f32.mrb[0].mxu0
    %v220 = vadd.f32 %v107, %v219
    %221 = vmatprep.mubr.f32.mxu0 0.0
    %222 = vmatmul.mubr.f32.gmra.mrb[0].mxu0 %v128
    %v223 = vpop.f32.mrb[0].mxu0
    %v224 = vadd.f32 %v103, %v223
    %v225 = vpop.f32.mrb[0].mxu0
    %v226 = vadd.f32 %v107, %v225
    %227 = vmatprep.mubr.f32.mxu0 0.0
    %228 = vmatmul.mubr.f32.gmra.mrb[0].mxu0 %v131
    %v229 = vpop.f32.mrb[0].mxu0
    %v230 = vadd.f32 %v103, %v229
    %v231 = vpop.f32.mrb[0].mxu0
    %v232 = vadd.f32 %v107, %v231
    %233 = vmatprep.mubr.f32.mxu0 0.0
    %234 = vmatmul.mubr.f32.gmra.mrb[0].mxu0 %v134
    %v235 = vpop.f32.mrb[0].mxu0
    %v236 = vadd.f32 %v103, %v235
    %v237 = vpop.f32.mrb[0].mxu0
    %v238 = vadd.f32 %v107, %v237
    %239 = vmatprep.mubr.f32.mxu0 0.0
    %240 = vmatmul.mubr.f32.gmra.mrb[0].mxu0 %v137
    %v241 = vpop.f32.mrb[0].mxu0
    %v242 = vadd.f32 %v103, %v241
    %v243 = vpop.f32.mrb[0].mxu0
    %v244 = vadd.f32 %v107, %v243
    %245 = vmatprep.mubr.f32.mxu0 0.0
    %246 = vmatmul.mubr.f32.gmra.mrb[0].mxu0 %v140
    %v247 = vpop.f32.mrb[0].mxu0
    %v248 = vadd.f32 %v103, %v247
    %v249 = vpop.f32.mrb[0].mxu0
    %v250 = vadd.f32 %v107, %v249
    %251 = vmatprep.mubr.f32.mxu0 0.0
    %252 = vmatmul.mubr.f32.gmra.mrb[0].mxu0 %v143
    %v253 = vpop.f32.mrb[0].mxu0
    %v254 = vadd.f32 %v103, %v253
    %v255 = vpop.f32.mrb[0].mxu0
    %v256 = vadd.f32 %v107, %v255
    %257 = vdwg.mxu0
    %258 = vmatprep.subr.mxu0 %v85
    %259 = vmatpush1.msra.mxu0 %v84
    %260 = vmatprep.subr.mxu0 %v89
    %261 = vmatpush1.msra.mxu0 %v88
    %262 = vmatprep.subr.mxu0 %v93
    %263 = vmatpush1.msra.mxu0 %v92
    %264 = vmatprep.subr.mxu0 %v97
    %265 = vmatpush1.msra.mxu0 %v96
    %266 = vmatprep.subr.mxu0 0.0
    %267 = vmatpush1.msra.mxu0 0.0
    %268 = vmatprep.subr.mxu0 0.0
    %269 = vmatpush1.msra.mxu0 0.0
    %270 = vmatprep.subr.mxu0 0.0
    %271 = vmatpush1.msra.mxu0 0.0
    %272 = vmatprep.subr.mxu0 0.0
    %273 = vmatpush1.msra.mxu0 0.0
    %274 = vmatprep.subr.mxu0 0.0
    %275 = vmatpush1.msra.mxu0 0.0
    %276 = vmatprep.subr.mxu0 0.0
    %277 = vmatpush1.msra.mxu0 0.0
    %278 = vmatprep.subr.mxu0 0.0
    %279 = vmatpush1.msra.mxu0 0.0
    %280 = vmatprep.subr.mxu0 0.0
    %281 = vmatpush1.msra.mxu0 0.0
    %282 = vmatprep.subr.mxu0 0.0
    %283 = vmatpush1.msra.mxu0 0.0
    %284 = vmatprep.subr.mxu0 0.0
    %285 = vmatpush1.msra.mxu0 0.0
    %286 = vmatprep.subr.mxu0 0.0
    %287 = vmatpush1.msra.mxu0 0.0
    %288 = vmatprep.subr.mxu0 0.0
    %289 = vmatpush1.msra.mxu0 0.0
    %290 = vmatprep.subr.mxu0 0.0
    %291 = vmatpush1.msra.mxu0 0.0
    %292 = vmatprep.subr.mxu0 0.0
    %293 = vmatpush1.msra.mxu0 0.0
    %294 = vmatprep.subr.mxu0 0.0
    %295 = vmatpush1.msra.mxu0 0.0
    %296 = vmatprep.subr.mxu0 0.0
    %297 = vmatpush1.msra.mxu0 0.0
    %298 = vmatprep.subr.mxu0 0.0
    %299 = vmatpush1.msra.mxu0 0.0
    %300 = vmatprep.subr.mxu0 0.0
    %301 = vmatpush1.msra.mxu0 0.0
    %302 = vmatprep.subr.mxu0 0.0
    %303 = vmatpush1.msra.mxu0 0.0
    %304 = vmatprep.subr.mxu0 0.0
    %305 = vmatpush1.msra.mxu0 0.0
    %306 = vmatprep.subr.mxu0 0.0
    %307 = vmatpush1.msra.mxu0 0.0
    %308 = vmatprep.subr.mxu0 0.0
    %309 = vmatpush1.msra.mxu0 0.0
    %310 = vmatprep.subr.mxu0 0.0
    %311 = vmatpush1.msra.mxu0 0.0
    %312 = vmatprep.subr.mxu0 0.0
    %313 = vmatpush1.msra.mxu0 0.0
    %314 = vmatprep.subr.mxu0 0.0
    %315 = vmatpush1.msra.mxu0 0.0
    %316 = vmatprep.subr.mxu0 0.0
    %317 = vmatpush1.msra.mxu0 0.0
    %318 = vmatprep.subr.mxu0 0.0
    %319 = vmatpush1.msra.mxu0 0.0
    %320 = vmatprep.subr.mxu0 0.0
    %321 = vmatpush1.msra.mxu0 0.0
    %322 = vmatprep.mubr.f32.mxu0 0.0
    %323 = vmatmul.mubr.f32.gmra.mrb[0].mxu0 %v122
    %v324 = vpop.f32.mrb[0].mxu0
    %v325 = vadd.f32 %v111, %v324
    %v326 = vpop.f32.mrb[0].mxu0
    %v327 = vadd.f32 %v115, %v326
    %328 = vmatprep.mubr.f32.mxu0 0.0
    %329 = vmatmul.mubr.f32.gmra.mrb[0].mxu0 %v125
    %v330 = vpop.f32.mrb[0].mxu0
    %v331 = vadd.f32 %v111, %v330
    %v332 = vpop.f32.mrb[0].mxu0
    %v333 = vadd.f32 %v115, %v332
    %334 = vmatprep.mubr.f32.mxu0 0.0
    %335 = vmatmul.mubr.f32.gmra.mrb[0].mxu0 %v128
    %v336 = vpop.f32.mrb[0].mxu0
    %v337 = vadd.f32 %v111, %v336
    %v338 = vpop.f32.mrb[0].mxu0
    %v339 = vadd.f32 %v115, %v338
    %340 = vmatprep.mubr.f32.mxu0 0.0
    %341 = vmatmul.mubr.f32.gmra.mrb[0].mxu0 %v131
    %v342 = vpop.f32.mrb[0].mxu0
    %v343 = vadd.f32 %v111, %v342
    %v344 = vpop.f32.mrb[0].mxu0
    %v345 = vadd.f32 %v115, %v344
    %346 = vmatprep.mubr.f32.mxu0 0.0
    %347 = vmatmul.mubr.f32.gmra.mrb[0].mxu0 %v134
    %v348 = vpop.f32.mrb[0].mxu0
    %v349 = vadd.f32 %v111, %v348
    %v350 = vpop.f32.mrb[0].mxu0
    %v351 = vadd.f32 %v115, %v350
    %352 = vmatprep.mubr.f32.mxu0 0.0
    %353 = vmatmul.mubr.f32.gmra.mrb[0].mxu0 %v137
    %v354 = vpop.f32.mrb[0].mxu0
    %v355 = vadd.f32 %v111, %v354
    %v356 = vpop.f32.mrb[0].mxu0
    %v357 = vadd.f32 %v115, %v356
    %358 = vmatprep.mubr.f32.mxu0 0.0
    %359 = vmatmul.mubr.f32.gmra.mrb[0].mxu0 %v140
    %v360 = vpop.f32.mrb[0].mxu0
    %v361 = vadd.f32 %v111, %v360
    %v362 = vpop.f32.mrb[0].mxu0
    %v363 = vadd.f32 %v115, %v362
    %364 = vmatprep.mubr.f32.mxu0 0.0
    %365 = vmatmul.mubr.f32.gmra.mrb[0].mxu0 %v143
    %v366 = vpop.f32.mrb[0].mxu0
    %v367 = vadd.f32 %v111, %v366
    %v368 = vpop.f32.mrb[0].mxu0
    %v369 = vadd.f32 %v115, %v368
    %370 = vdwg.mxu0
    %371 = vst [vmem:[#allocation2] sm:$0xff] %v212
    %372 = vst [vmem:[#allocation2 + $0x8] sm:$0xff] %v214
    %373 = vst [vmem:[#allocation2 + $0x10] sm:$0xff] %v325
    %374 = vst [vmem:[#allocation2 + $0x18] sm:$0xff] %v327
    %375 = vst [vmem:[#allocation2 + $0x20] sm:$0xff] %v218
    %376 = vst [vmem:[#allocation2 + $0x28] sm:$0xff] %v220
    %377 = vst [vmem:[#allocation2 + $0x30] sm:$0xff] %v331
    %378 = vst [vmem:[#allocation2 + $0x38] sm:$0xff] %v333
    %379 = vst [vmem:[#allocation2 + $0x40] sm:$0xff] %v224
    %380 = vst [vmem:[#allocation2 + $0x48] sm:$0xff] %v226
    %381 = vst [vmem:[#allocation2 + $0x50] sm:$0xff] %v337
    %382 = vst [vmem:[#allocation2 + $0x58] sm:$0xff] %v339
    %383 = vst [vmem:[#allocation2 + $0x60] sm:$0xff] %v230
    %384 = vst [vmem:[#allocation2 + $0x68] sm:$0xff] %v232
    %385 = vst [vmem:[#allocation2 + $0x70] sm:$0xff] %v343
    %386 = vst [vmem:[#allocation2 + $0x78] sm:$0xff] %v345
    %387 = vst [vmem:[#allocation2 + $0x80] sm:$0xff] %v236
    %388 = vst [vmem:[#allocation2 + $0x88] sm:$0xff] %v238
    %389 = vst [vmem:[#allocation2 + $0x90] sm:$0xff] %v349
    %390 = vst [vmem:[#allocation2 + $0x98] sm:$0xff] %v351
    %391 = vst [vmem:[#allocation2 + $0xa0] sm:$0xff] %v242
    %392 = vst [vmem:[#allocation2 + $0xa8] sm:$0xff] %v244
    %393 = vst [vmem:[#allocation2 + $0xb0] sm:$0xff] %v355
    %394 = vst [vmem:[#allocation2 + $0xb8] sm:$0xff] %v357
    %395 = vst [vmem:[#allocation2 + $0xc0] sm:$0xff] %v248
    %396 = vst [vmem:[#allocation2 + $0xc8] sm:$0xff] %v250
    %397 = vst [vmem:[#allocation2 + $0xd0] sm:$0xff] %v361
    %398 = vst [vmem:[#allocation2 + $0xd8] sm:$0xff] %v363
    %399 = vst [vmem:[#allocation2 + $0xe0] sm:$0xff] %v254
    %400 = vst [vmem:[#allocation2 + $0xe8] sm:$0xff] %v256
    %401 = vst [vmem:[#allocation2 + $0xf0] sm:$0xff] %v367
    %402 = vst [vmem:[#allocation2 + $0xf8] sm:$0xff] %v369
    %v403 = vld [vmem:[%s1] sm:$0xff]
    %s404 = smul.u32 0, 8
    %v405 = vld [vmem:[#allocation3] sm:$0xff]
    %v406 = vld [vmem:[#allocation4] sm:$0xff]
    %s407 = smul.u32 0, 4
    %s408 = smul.addr %s407, 8
    %s409 = scalar_lea.vmem [#allocation2], %s408
    %v410 = vld [vmem:[%s409] sm:$0xff]
    %v411 = vld [vmem:[%s409 + $0x8] sm:$0xff]
    %v412 = vld [vmem:[%s409 + $0x10] sm:$0xff]
    %v413 = vld [vmem:[%s409 + $0x18] sm:$0xff]
    %v414 = vld [vmem:[#allocation8] sm:$0xff]
    %v415 = vld [vmem:[#allocation8 + $0x8] sm:$0xff]
    %v416 = vld [vmem:[#allocation8 + $0x10] sm:$0xff]
    %v417 = vld [vmem:[#allocation8 + $0x18] sm:$0xff]
    %v418 = vld [vmem:[#allocation8 + $0x20] sm:$0xff]
    %v419 = vld [vmem:[#allocation8 + $0x28] sm:$0xff]
    %v420 = vld [vmem:[#allocation8 + $0x30] sm:$0xff]
    %v421 = vld [vmem:[#allocation8 + $0x38] sm:$0xff]
    %v422 = vld [vmem:[#allocation8 + $0x40] sm:$0xff]
    %v423 = vld [vmem:[#allocation8 + $0x48] sm:$0xff]
    %v424 = vld [vmem:[#allocation8 + $0x50] sm:$0xff]
    %v425 = vld [vmem:[#allocation8 + $0x58] sm:$0xff]
    %v426 = vld [vmem:[#allocation8 + $0x60] sm:$0xff]
    %v427 = vld [vmem:[#allocation8 + $0x68] sm:$0xff]
    %v428 = vld [vmem:[#allocation8 + $0x70] sm:$0xff]
    %v429 = vld [vmem:[#allocation8 + $0x78] sm:$0xff]
    %v430 = vld [vmem:[#allocation8 + $0x80] sm:$0xff]
    %v431 = vld [vmem:[#allocation8 + $0x88] sm:$0xff]
    %v432 = vld [vmem:[#allocation8 + $0x90] sm:$0xff]
    %v433 = vld [vmem:[#allocation8 + $0x98] sm:$0xff]
    %v434 = vld [vmem:[#allocation8 + $0xa0] sm:$0xff]
    %v435 = vld [vmem:[#allocation8 + $0xa8] sm:$0xff]
    %v436 = vld [vmem:[#allocation8 + $0xb0] sm:$0xff]
    %v437 = vld [vmem:[#allocation8 + $0xb8] sm:$0xff]
    %v438 = vld [vmem:[#allocation8 + $0xc0] sm:$0xff]
    %v439 = vld [vmem:[#allocation8 + $0xc8] sm:$0xff]
    %v440 = vld [vmem:[#allocation8 + $0xd0] sm:$0xff]
    %v441 = vld [vmem:[#allocation8 + $0xd8] sm:$0xff]
    %v442 = vld [vmem:[#allocation8 + $0xe0] sm:$0xff]
    %v443 = vld [vmem:[#allocation8 + $0xe8] sm:$0xff]
    %v444 = vld [vmem:[#allocation8 + $0xf0] sm:$0xff]
    %v445 = vld [vmem:[#allocation8 + $0xf8] sm:$0xff]
    %v446 = vld [vmem:[#allocation8 + $0x100] sm:$0xff]
    %v447 = vld [vmem:[#allocation8 + $0x108] sm:$0xff]
    %v448 = vld [vmem:[#allocation8 + $0x110] sm:$0xff]
    %v449 = vld [vmem:[#allocation8 + $0x118] sm:$0xff]
    %v450 = vld [vmem:[#allocation8 + $0x120] sm:$0xff]
    %v451 = vld [vmem:[#allocation8 + $0x128] sm:$0xff]
    %v452 = vld [vmem:[#allocation8 + $0x130] sm:$0xff]
    %v453 = vld [vmem:[#allocation8 + $0x138] sm:$0xff]
    %v454 = vld [vmem:[#allocation8 + $0x140] sm:$0xff]
    %v455 = vld [vmem:[#allocation8 + $0x148] sm:$0xff]
    %v456 = vld [vmem:[#allocation8 + $0x150] sm:$0xff]
    %v457 = vld [vmem:[#allocation8 + $0x158] sm:$0xff]
    %v458 = vld [vmem:[#allocation8 + $0x160] sm:$0xff]
    %v459 = vld [vmem:[#allocation8 + $0x168] sm:$0xff]
    %v460 = vld [vmem:[#allocation8 + $0x170] sm:$0xff]
    %v461 = vld [vmem:[#allocation8 + $0x178] sm:$0xff]
    %v462 = vld [vmem:[#allocation8 + $0x180] sm:$0xff]
    %v463 = vld [vmem:[#allocation8 + $0x188] sm:$0xff]
    %v464 = vld [vmem:[#allocation8 + $0x190] sm:$0xff]
    %v465 = vld [vmem:[#allocation8 + $0x198] sm:$0xff]
    %v466 = vld [vmem:[#allocation8 + $0x1a0] sm:$0xff]
    %v467 = vld [vmem:[#allocation8 + $0x1a8] sm:$0xff]
    %v468 = vld [vmem:[#allocation8 + $0x1b0] sm:$0xff]
    %v469 = vld [vmem:[#allocation8 + $0x1b8] sm:$0xff]
    %v470 = vld [vmem:[#allocation8 + $0x1c0] sm:$0xff]
    %v471 = vld [vmem:[#allocation8 + $0x1c8] sm:$0xff]
    %v472 = vld [vmem:[#allocation8 + $0x1d0] sm:$0xff]
    %v473 = vld [vmem:[#allocation8 + $0x1d8] sm:$0xff]
    %v474 = vld [vmem:[#allocation8 + $0x1e0] sm:$0xff]
    %v475 = vld [vmem:[#allocation8 + $0x1e8] sm:$0xff]
    %v476 = vld [vmem:[#allocation8 + $0x1f0] sm:$0xff]
    %v477 = vld [vmem:[#allocation8 + $0x1f8] sm:$0xff]
    %478 = vmatprep.subr.mxu0 %v415
    %479 = vmatpush1.msra.mxu0 %v414
    %480 = vmatprep.subr.mxu0 %v419
    %481 = vmatpush1.msra.mxu0 %v418
    %482 = vmatprep.subr.mxu0 %v423
    %483 = vmatpush1.msra.mxu0 %v422
    %484 = vmatprep.subr.mxu0 %v427
    %485 = vmatpush1.msra.mxu0 %v426
    %486 = vmatprep.subr.mxu0 %v431
    %487 = vmatpush1.msra.mxu0 %v430
    %488 = vmatprep.subr.mxu0 %v435
    %489 = vmatpush1.msra.mxu0 %v434
    %490 = vmatprep.subr.mxu0 %v439
    %491 = vmatpush1.msra.mxu0 %v438
    %492 = vmatprep.subr.mxu0 %v443
    %493 = vmatpush1.msra.mxu0 %v442
    %494 = vmatprep.subr.mxu0 %v447
    %495 = vmatpush1.msra.mxu0 %v446
    %496 = vmatprep.subr.mxu0 %v451
    %497 = vmatpush1.msra.mxu0 %v450
    %498 = vmatprep.subr.mxu0 %v455
    %499 = vmatpush1.msra.mxu0 %v454
    %500 = vmatprep.subr.mxu0 %v459
    %501 = vmatpush1.msra.mxu0 %v458
    %502 = vmatprep.subr.mxu0 %v463
    %503 = vmatpush1.msra.mxu0 %v462
    %504 = vmatprep.subr.mxu0 %v467
    %505 = vmatpush1.msra.mxu0 %v466
    %506 = vmatprep.subr.mxu0 %v471
    %507 = vmatpush1.msra.mxu0 %v470
    %508 = vmatprep.subr.mxu0 %v475
    %509 = vmatpush1.msra.mxu0 %v474
    %510 = vmatprep.subr.mxu0 0.0
    %511 = vmatpush1.msra.mxu0 0.0
    %512 = vmatprep.subr.mxu0 0.0
    %513 = vmatpush1.msra.mxu0 0.0
    %514 = vmatprep.subr.mxu0 0.0
    %515 = vmatpush1.msra.mxu0 0.0
    %516 = vmatprep.subr.mxu0 0.0
    %517 = vmatpush1.msra.mxu0 0.0
    %518 = vmatprep.subr.mxu0 0.0
    %519 = vmatpush1.msra.mxu0 0.0
    %520 = vmatprep.subr.mxu0 0.0
    %521 = vmatpush1.msra.mxu0 0.0
    %522 = vmatprep.subr.mxu0 0.0
    %523 = vmatpush1.msra.mxu0 0.0
    %524 = vmatprep.subr.mxu0 0.0
    %525 = vmatpush1.msra.mxu0 0.0
    %526 = vmatprep.subr.mxu0 0.0
    %527 = vmatpush1.msra.mxu0 0.0
    %528 = vmatprep.subr.mxu0 0.0
    %529 = vmatpush1.msra.mxu0 0.0
    %530 = vmatprep.subr.mxu0 0.0
    %531 = vmatpush1.msra.mxu0 0.0
    %532 = vmatprep.subr.mxu0 0.0
    %533 = vmatpush1.msra.mxu0 0.0
    %534 = vmatprep.subr.mxu0 0.0
    %535 = vmatpush1.msra.mxu0 0.0
    %536 = vmatprep.subr.mxu0 0.0
    %537 = vmatpush1.msra.mxu0 0.0
    %538 = vmatprep.subr.mxu0 0.0
    %539 = vmatpush1.msra.mxu0 0.0
    %540 = vmatprep.subr.mxu0 0.0
    %541 = vmatpush1.msra.mxu0 0.0
    %542 = vmatprep.mubr.f32.mxu0 0.0
    %543 = vmatmul.mubr.f32.gmra.mrb[0].mxu0 %v405
    %v544 = vpop.f32.mrb[0].mxu0
    %v545 = vadd.f32 0.0, %v544
    %v546 = vpop.f32.mrb[0].mxu0
    %v547 = vadd.f32 0.0, %v546
    %548 = vdwg.mxu0
    %549 = vmatprep.subr.mxu0 %v417
    %550 = vmatpush1.msra.mxu0 %v416
    %551 = vmatprep.subr.mxu0 %v421
    %552 = vmatpush1.msra.mxu0 %v420
    %553 = vmatprep.subr.mxu0 %v425
    %554 = vmatpush1.msra.mxu0 %v424
    %555 = vmatprep.subr.mxu0 %v429
    %556 = vmatpush1.msra.mxu0 %v428
    %557 = vmatprep.subr.mxu0 %v433
    %558 = vmatpush1.msra.mxu0 %v432
    %559 = vmatprep.subr.mxu0 %v437
    %560 = vmatpush1.msra.mxu0 %v436
    %561 = vmatprep.subr.mxu0 %v441
    %562 = vmatpush1.msra.mxu0 %v440
    %563 = vmatprep.subr.mxu0 %v445
    %564 = vmatpush1.msra.mxu0 %v444
    %565 = vmatprep.subr.mxu0 %v449
    %566 = vmatpush1.msra.mxu0 %v448
    %567 = vmatprep.subr.mxu0 %v453
    %568 = vmatpush1.msra.mxu0 %v452
    %569 = vmatprep.subr.mxu0 %v457
    %570 = vmatpush1.msra.mxu0 %v456
    %571 = vmatprep.subr.mxu0 %v461
    %572 = vmatpush1.msra.mxu0 %v460
    %573 = vmatprep.subr.mxu0 %v465
    %574 = vmatpush1.msra.mxu0 %v464
    %575 = vmatprep.subr.mxu0 %v469
    %576 = vmatpush1.msra.mxu0 %v468
    %577 = vmatprep.subr.mxu0 %v473
    %578 = vmatpush1.msra.mxu0 %v472
    %579 = vmatprep.subr.mxu0 %v477
    %580 = vmatpush1.msra.mxu0 %v476
    %581 = vmatprep.subr.mxu0 0.0
    %582 = vmatpush1.msra.mxu0 0.0
    %583 = vmatprep.subr.mxu0 0.0
    %584 = vmatpush1.msra.mxu0 0.0
    %585 = vmatprep.subr.mxu0 0.0
    %586 = vmatpush1.msra.mxu0 0.0
    %587 = vmatprep.subr.mxu0 0.0
    %588 = vmatpush1.msra.mxu0 0.0
    %589 = vmatprep.subr.mxu0 0.0
    %590 = vmatpush1.msra.mxu0 0.0
    %591 = vmatprep.subr.mxu0 0.0
    %592 = vmatpush1.msra.mxu0 0.0
    %593 = vmatprep.subr.mxu0 0.0
    %594 = vmatpush1.msra.mxu0 0.0
    %595 = vmatprep.subr.mxu0 0.0
    %596 = vmatpush1.msra.mxu0 0.0
    %597 = vmatprep.subr.mxu0 0.0
    %598 = vmatpush1.msra.mxu0 0.0
    %599 = vmatprep.subr.mxu0 0.0
    %600 = vmatpush1.msra.mxu0 0.0
    %601 = vmatprep.subr.mxu0 0.0
    %602 = vmatpush1.msra.mxu0 0.0
    %603 = vmatprep.subr.mxu0 0.0
    %604 = vmatpush1.msra.mxu0 0.0
    %605 = vmatprep.subr.mxu0 0.0
    %606 = vmatpush1.msra.mxu0 0.0
    %607 = vmatprep.subr.mxu0 0.0
    %608 = vmatpush1.msra.mxu0 0.0
    %609 = vmatprep.subr.mxu0 0.0
    %610 = vmatpush1.msra.mxu0 0.0
    %611 = vmatprep.subr.mxu0 0.0
    %612 = vmatpush1.msra.mxu0 0.0
    %613 = vmatprep.mubr.f32.mxu0 0.0
    %614 = vmatmul.mubr.f32.gmra.mrb[0].mxu0 %v405
    %v615 = vpop.f32.mrb[0].mxu0
    %v616 = vadd.f32 0.0, %v615
    %v617 = vpop.f32.mrb[0].mxu0
    %v618 = vadd.f32 0.0, %v617
    %619 = vdwg.mxu0
    %v620 = vadd.f32 %v410, %v545
    %v621 = vadd.f32 %v411, %v547
    %v622 = vadd.f32 %v412, %v616
    %v623 = vadd.f32 %v413, %v618
    %v624 = vxor.u32 %v620, 2147483648
    %v625 = vmul.f32 %v624, 1.442695
    %v626 = vpow.pop %v625
    %v627 = vadd.f32 %v626, 1.0
    %v628 = vrcp.pop %v627
    %v629 = vmul.f32 1.0, %v628
    %v630 = vxor.u32 %v621, 2147483648
    %v631 = vmul.f32 %v630, 1.442695
    %v632 = vpow.pop %v631
    %v633 = vadd.f32 %v632, 1.0
    %v634 = vrcp.pop %v633
    %v635 = vmul.f32 1.0, %v634
    %v636 = vtanh.pop %v622
    %v637 = vxor.u32 %v623, 2147483648
    %v638 = vmul.f32 %v637, 1.442695
    %v639 = vpow.pop %v638
    %v640 = vadd.f32 %v639, 1.0
    %v641 = vrcp.pop %v640
    %v642 = vmul.f32 1.0, %v641
    %v643 = vmul.f32 %v635, %v406
    %v644 = vmul.f32 %v629, %v636
    %v645 = vadd.f32 %v643, %v644
    %v646 = vtanh.pop %v645
    %v647 = vmul.f32 %v642, %v646
    %v648 = vstv %s404
    %vm649 = vcmp.lt.s32.totalorder %v648, %v403
    %v650 = vsel %vm649, 1, 0
    %651 = vset.pattern.permute.xlu0 0
    %652 = vperm.xlu0 %651, %v650
    %v653 = vpop.permute.xlu0 %652
    %vm654 = vcmp.eq.s32.totalorder %v653, 1
    %v655 = vsel %vm654, %v645, %v406
    %v656 = vsel %vm654, %v647, %v405
    %s657 = smul.u32 1, 4
    %s658 = smul.addr %s657, 8
    %s659 = scalar_lea.vmem [#allocation2], %s658
    %v660 = vld [vmem:[%s659] sm:$0xff]
    %v661 = vld [vmem:[%s659 + $0x8] sm:$0xff]
    %v662 = vld [vmem:[%s659 + $0x10] sm:$0xff]
    %v663 = vld [vmem:[%s659 + $0x18] sm:$0xff]
    %664 = vmatprep.subr.mxu0 %v415
    %665 = vmatpush1.msra.mxu0 %v414
    %666 = vmatprep.subr.mxu0 %v419
    %667 = vmatpush1.msra.mxu0 %v418
    %668 = vmatprep.subr.mxu0 %v423
    %669 = vmatpush1.msra.mxu0 %v422
    %670 = vmatprep.subr.mxu0 %v427
    %671 = vmatpush1.msra.mxu0 %v426
    %672 = vmatprep.subr.mxu0 %v431
    %673 = vmatpush1.msra.mxu0 %v430
    %674 = vmatprep.subr.mxu0 %v435
    %675 = vmatpush1.msra.mxu0 %v434
    %676 = vmatprep.subr.mxu0 %v439
    %677 = vmatpush1.msra.mxu0 %v438
    %678 = vmatprep.subr.mxu0 %v443
    %679 = vmatpush1.msra.mxu0 %v442
    %680 = vmatprep.subr.mxu0 %v447
    %681 = vmatpush1.msra.mxu0 %v446
    %682 = vmatprep.subr.mxu0 %v451
    %683 = vmatpush1.msra.mxu0 %v450
    %684 = vmatprep.subr.mxu0 %v455
    %685 = vmatpush1.msra.mxu0 %v454
    %686 = vmatprep.subr.mxu0 %v459
    %687 = vmatpush1.msra.mxu0 %v458
    %688 = vmatprep.subr.mxu0 %v463
    %689 = vmatpush1.msra.mxu0 %v462
    %690 = vmatprep.subr.mxu0 %v467
    %691 = vmatpush1.msra.mxu0 %v466
    %692 = vmatprep.subr.mxu0 %v471
    %693 = vmatpush1.msra.mxu0 %v470
    %694 = vmatprep.subr.mxu0 %v475
    %695 = vmatpush1.msra.mxu0 %v474
    %696 = vmatprep.subr.mxu0 0.0
    %697 = vmatpush1.msra.mxu0 0.0
    %698 = vmatprep.subr.mxu0 0.0
    %699 = vmatpush1.msra.mxu0 0.0
    %700 = vmatprep.subr.mxu0 0.0
    %701 = vmatpush1.msra.mxu0 0.0
    %702 = vmatprep.subr.mxu0 0.0
    %703 = vmatpush1.msra.mxu0 0.0
    %704 = vmatprep.subr.mxu0 0.0
    %705 = vmatpush1.msra.mxu0 0.0
    %706 = vmatprep.subr.mxu0 0.0
    %707 = vmatpush1.msra.mxu0 0.0
    %708 = vmatprep.subr.mxu0 0.0
    %709 = vmatpush1.msra.mxu0 0.0
    %710 = vmatprep.subr.mxu0 0.0
    %711 = vmatpush1.msra.mxu0 0.0
    %712 = vmatprep.subr.mxu0 0.0
    %713 = vmatpush1.msra.mxu0 0.0
    %714 = vmatprep.subr.mxu0 0.0
    %715 = vmatpush1.msra.mxu0 0.0
    %716 = vmatprep.subr.mxu0 0.0
    %717 = vmatpush1.msra.mxu0 0.0
    %718 = vmatprep.subr.mxu0 0.0
    %719 = vmatpush1.msra.mxu0 0.0
    %720 = vmatprep.subr.mxu0 0.0
    %721 = vmatpush1.msra.mxu0 0.0
    %722 = vmatprep.subr.mxu0 0.0
    %723 = vmatpush1.msra.mxu0 0.0
    %724 = vmatprep.subr.mxu0 0.0
    %725 = vmatpush1.msra.mxu0 0.0
    %726 = vmatprep.subr.mxu0 0.0
    %727 = vmatpush1.msra.mxu0 0.0
    %728 = vmatprep.mubr.f32.mxu0 0.0
    %729 = vmatmul.mubr.f32.gmra.mrb[0].mxu0 %v656
    %v730 = vpop.f32.mrb[0].mxu0
    %v731 = vadd.f32 0.0, %v730
    %v732 = vpop.f32.mrb[0].mxu0
    %v733 = vadd.f32 0.0, %v732
    %734 = vdwg.mxu0
    %735 = vmatprep.subr.mxu0 %v417
    %736 = vmatpush1.msra.mxu0 %v416
    %737 = vmatprep.subr.mxu0 %v421
    %738 = vmatpush1.msra.mxu0 %v420
    %739 = vmatprep.subr.mxu0 %v425
    %740 = vmatpush1.msra.mxu0 %v424
    %741 = vmatprep.subr.mxu0 %v429
    %742 = vmatpush1.msra.mxu0 %v428
    %743 = vmatprep.subr.mxu0 %v433
    %744 = vmatpush1.msra.mxu0 %v432
    %745 = vmatprep.subr.mxu0 %v437
    %746 = vmatpush1.msra.mxu0 %v436
    %747 = vmatprep.subr.mxu0 %v441
    %748 = vmatpush1.msra.mxu0 %v440
    %749 = vmatprep.subr.mxu0 %v445
    %750 = vmatpush1.msra.mxu0 %v444
    %751 = vmatprep.subr.mxu0 %v449
    %752 = vmatpush1.msra.mxu0 %v448
    %753 = vmatprep.subr.mxu0 %v453
    %754 = vmatpush1.msra.mxu0 %v452
    %755 = vmatprep.subr.mxu0 %v457
    %756 = vmatpush1.msra.mxu0 %v456
    %757 = vmatprep.subr.mxu0 %v461
    %758 = vmatpush1.msra.mxu0 %v460
    %759 = vmatprep.subr.mxu0 %v465
    %760 = vmatpush1.msra.mxu0 %v464
    %761 = vmatprep.subr.mxu0 %v469
    %762 = vmatpush1.msra.mxu0 %v468
    %763 = vmatprep.subr.mxu0 %v473
    %764 = vmatpush1.msra.mxu0 %v472
    %765 = vmatprep.subr.mxu0 %v477
    %766 = vmatpush1.msra.mxu0 %v476
    %767 = vmatprep.subr.mxu0 0.0
    %768 = vmatpush1.msra.mxu0 0.0
    %769 = vmatprep.subr.mxu0 0.0
    %770 = vmatpush1.msra.mxu0 0.0
    %771 = vmatprep.subr.mxu0 0.0
    %772 = vmatpush1.msra.mxu0 0.0
    %773 = vmatprep.subr.mxu0 0.0
    %774 = vmatpush1.msra.mxu0 0.0
    %775 = vmatprep.subr.mxu0 0.0
    %776 = vmatpush1.msra.mxu0 0.0
    %777 = vmatprep.subr.mxu0 0.0
    %778 = vmatpush1.msra.mxu0 0.0
    %779 = vmatprep.subr.mxu0 0.0
    %780 = vmatpush1.msra.mxu0 0.0
    %781 = vmatprep.subr.mxu0 0.0
    %782 = vmatpush1.msra.mxu0 0.0
    %783 = vmatprep.subr.mxu0 0.0
    %784 = vmatpush1.msra.mxu0 0.0
    %785 = vmatprep.subr.mxu0 0.0
    %786 = vmatpush1.msra.mxu0 0.0
    %787 = vmatprep.subr.mxu0 0.0
    %788 = vmatpush1.msra.mxu0 0.0
    %789 = vmatprep.subr.mxu0 0.0
    %790 = vmatpush1.msra.mxu0 0.0
    %791 = vmatprep.subr.mxu0 0.0
    %792 = vmatpush1.msra.mxu0 0.0
    %793 = vmatprep.subr.mxu0 0.0
    %794 = vmatpush1.msra.mxu0 0.0
    %795 = vmatprep.subr.mxu0 0.0
    %796 = vmatpush1.msra.mxu0 0.0
    %797 = vmatprep.subr.mxu0 0.0
    %798 = vmatpush1.msra.mxu0 0.0
    %799 = vmatprep.mubr.f32.mxu0 0.0
    %800 = vmatmul.mubr.f32.gmra.mrb[0].mxu0 %v656
    %v801 = vpop.f32.mrb[0].mxu0
    %v802 = vadd.f32 0.0, %v801
    %v803 = vpop.f32.mrb[0].mxu0
    %v804 = vadd.f32 0.0, %v803
    %805 = vdwg.mxu0
    %v806 = vadd.f32 %v660, %v731
    %v807 = vadd.f32 %v661, %v733
    %v808 = vadd.f32 %v662, %v802
    %v809 = vadd.f32 %v663, %v804
    %v810 = vxor.u32 %v806, 2147483648
    %v811 = vmul.f32 %v810, 1.442695
    %v812 = vpow.pop %v811
    %v813 = vadd.f32 %v812, 1.0
    %v814 = vrcp.pop %v813
    %v815 = vmul.f32 1.0, %v814
    %v816 = vxor.u32 %v807, 2147483648
    %v817 = vmul.f32 %v816, 1.442695
    %v818 = vpow.pop %v817
    %v819 = vadd.f32 %v818, 1.0
    %v820 = vrcp.pop %v819
    %v821 = vmul.f32 1.0, %v820
    %v822 = vtanh.pop %v808
    %v823 = vxor.u32 %v809, 2147483648
    %v824 = vmul.f32 %v823, 1.442695
    %v825 = vpow.pop %v824
    %v826 = vadd.f32 %v825, 1.0
    %v827 = vrcp.pop %v826
    %v828 = vmul.f32 1.0, %v827
    %v829 = vmul.f32 %v821, %v655
    %v830 = vmul.f32 %v815, %v822
    %v831 = vadd.f32 %v829, %v830
    %v832 = vtanh.pop %v831
    %v833 = vmul.f32 %v828, %v832
    %s834 = sadd.s32 %s404, 1
    %v835 = vstv %s834
    %vm836 = vcmp.lt.s32.totalorder %v835, %v403
    %v837 = vsel %vm836, 1, 0
    %838 = vset.pattern.permute.xlu0 0
    %839 = vperm.xlu0 %838, %v837
    %v840 = vpop.permute.xlu0 %839
    %vm841 = vcmp.eq.s32.totalorder %v840, 1
    %v842 = vsel %vm841, %v831, %v655
    %v843 = vsel %vm841, %v833, %v656
    %s844 = smul.u32 2, 4
    %s845 = smul.addr %s844, 8
    %s846 = scalar_lea.vmem [#allocation2], %s845
    %v847 = vld [vmem:[%s846] sm:$0xff]
    %v848 = vld [vmem:[%s846 + $0x8] sm:$0xff]
    %v849 = vld [vmem:[%s846 + $0x10] sm:$0xff]
    %v850 = vld [vmem:[%s846 + $0x18] sm:$0xff]
    %851 = vmatprep.subr.mxu0 %v415
    %852 = vmatpush1.msra.mxu0 %v414
    %853 = vmatprep.subr.mxu0 %v419
    %854 = vmatpush1.msra.mxu0 %v418
    %855 = vmatprep.subr.mxu0 %v423
    %856 = vmatpush1.msra.mxu0 %v422
    %857 = vmatprep.subr.mxu0 %v427
    %858 = vmatpush1.msra.mxu0 %v426
    %859 = vmatprep.subr.mxu0 %v431
    %860 = vmatpush1.msra.mxu0 %v430
    %861 = vmatprep.subr.mxu0 %v435
    %862 = vmatpush1.msra.mxu0 %v434
    %863 = vmatprep.subr.mxu0 %v439
    %864 = vmatpush1.msra.mxu0 %v438
    %865 = vmatprep.subr.mxu0 %v443
    %866 = vmatpush1.msra.mxu0 %v442
    %867 = vmatprep.subr.mxu0 %v447
    %868 = vmatpush1.msra.mxu0 %v446
    %869 = vmatprep.subr.mxu0 %v451
    %870 = vmatpush1.msra.mxu0 %v450
    %871 = vmatprep.subr.mxu0 %v455
    %872 = vmatpush1.msra.mxu0 %v454
    %873 = vmatprep.subr.mxu0 %v459
    %874 = vmatpush1.msra.mxu0 %v458
    %875 = vmatprep.subr.mxu0 %v463
    %876 = vmatpush1.msra.mxu0 %v462
    %877 = vmatprep.subr.mxu0 %v467
    %878 = vmatpush1.msra.mxu0 %v466
    %879 = vmatprep.subr.mxu0 %v471
    %880 = vmatpush1.msra.mxu0 %v470
    %881 = vmatprep.subr.mxu0 %v475
    %882 = vmatpush1.msra.mxu0 %v474
    %883 = vmatprep.subr.mxu0 0.0
    %884 = vmatpush1.msra.mxu0 0.0
    %885 = vmatprep.subr.mxu0 0.0
    %886 = vmatpush1.msra.mxu0 0.0
    %887 = vmatprep.subr.mxu0 0.0
    %888 = vmatpush1.msra.mxu0 0.0
    %889 = vmatprep.subr.mxu0 0.0
    %890 = vmatpush1.msra.mxu0 0.0
    %891 = vmatprep.subr.mxu0 0.0
    %892 = vmatpush1.msra.mxu0 0.0
    %893 = vmatprep.subr.mxu0 0.0
    %894 = vmatpush1.msra.mxu0 0.0
    %895 = vmatprep.subr.mxu0 0.0
    %896 = vmatpush1.msra.mxu0 0.0
    %897 = vmatprep.subr.mxu0 0.0
    %898 = vmatpush1.msra.mxu0 0.0
    %899 = vmatprep.subr.mxu0 0.0
    %900 = vmatpush1.msra.mxu0 0.0
    %901 = vmatprep.subr.mxu0 0.0
    %902 = vmatpush1.msra.mxu0 0.0
    %903 = vmatprep.subr.mxu0 0.0
    %904 = vmatpush1.msra.mxu0 0.0
    %905 = vmatprep.subr.mxu0 0.0
    %906 = vmatpush1.msra.mxu0 0.0
    %907 = vmatprep.subr.mxu0 0.0
    %908 = vmatpush1.msra.mxu0 0.0
    %909 = vmatprep.subr.mxu0 0.0
    %910 = vmatpush1.msra.mxu0 0.0
    %911 = vmatprep.subr.mxu0 0.0
    %912 = vmatpush1.msra.mxu0 0.0
    %913 = vmatprep.subr.mxu0 0.0
    %914 = vmatpush1.msra.mxu0 0.0
    %915 = vmatprep.mubr.f32.mxu0 0.0
    %916 = vmatmul.mubr.f32.gmra.mrb[0].mxu0 %v843
    %v917 = vpop.f32.mrb[0].mxu0
    %v918 = vadd.f32 0.0, %v917
    %v919 = vpop.f32.mrb[0].mxu0
    %v920 = vadd.f32 0.0, %v919
    %921 = vdwg.mxu0
    %922 = vmatprep.subr.mxu0 %v417
    %923 = vmatpush1.msra.mxu0 %v416
    %924 = vmatprep.subr.mxu0 %v421
    %925 = vmatpush1.msra.mxu0 %v420
    %926 = vmatprep.subr.mxu0 %v425
    %927 = vmatpush1.msra.mxu0 %v424
    %928 = vmatprep.subr.mxu0 %v429
    %929 = vmatpush1.msra.mxu0 %v428
    %930 = vmatprep.subr.mxu0 %v433
    %931 = vmatpush1.msra.mxu0 %v432
    %932 = vmatprep.subr.mxu0 %v437
    %933 = vmatpush1.msra.mxu0 %v436
    %934 = vmatprep.subr.mxu0 %v441
    %935 = vmatpush1.msra.mxu0 %v440
    %936 = vmatprep.subr.mxu0 %v445
    %937 = vmatpush1.msra.mxu0 %v444
    %938 = vmatprep.subr.mxu0 %v449
    %939 = vmatpush1.msra.mxu0 %v448
    %940 = vmatprep.subr.mxu0 %v453
    %941 = vmatpush1.msra.mxu0 %v452
    %942 = vmatprep.subr.mxu0 %v457
    %943 = vmatpush1.msra.mxu0 %v456
    %944 = vmatprep.subr.mxu0 %v461
    %945 = vmatpush1.msra.mxu0 %v460
    %946 = vmatprep.subr.mxu0 %v465
    %947 = vmatpush1.msra.mxu0 %v464
    %948 = vmatprep.subr.mxu0 %v469
    %949 = vmatpush1.msra.mxu0 %v468
    %950 = vmatprep.subr.mxu0 %v473
    %951 = vmatpush1.msra.mxu0 %v472
    %952 = vmatprep.subr.mxu0 %v477
    %953 = vmatpush1.msra.mxu0 %v476
    %954 = vmatprep.subr.mxu0 0.0
    %955 = vmatpush1.msra.mxu0 0.0
    %956 = vmatprep.subr.mxu0 0.0
    %957 = vmatpush1.msra.mxu0 0.0
    %958 = vmatprep.subr.mxu0 0.0
    %959 = vmatpush1.msra.mxu0 0.0
    %960 = vmatprep.subr.mxu0 0.0
    %961 = vmatpush1.msra.mxu0 0.0
    %962 = vmatprep.subr.mxu0 0.0
    %963 = vmatpush1.msra.mxu0 0.0
    %964 = vmatprep.subr.mxu0 0.0
    %965 = vmatpush1.msra.mxu0 0.0
    %966 = vmatprep.subr.mxu0 0.0
    %967 = vmatpush1.msra.mxu0 0.0
    %968 = vmatprep.subr.mxu0 0.0
    %969 = vmatpush1.msra.mxu0 0.0
    %970 = vmatprep.subr.mxu0 0.0
    %971 = vmatpush1.msra.mxu0 0.0
    %972 = vmatprep.subr.mxu0 0.0
    %973 = vmatpush1.msra.mxu0 0.0
    %974 = vmatprep.subr.mxu0 0.0
    %975 = vmatpush1.msra.mxu0 0.0
    %976 = vmatprep.subr.mxu0 0.0
    %977 = vmatpush1.msra.mxu0 0.0
    %978 = vmatprep.subr.mxu0 0.0
    %979 = vmatpush1.msra.mxu0 0.0
    %980 = vmatprep.subr.mxu0 0.0
    %981 = vmatpush1.msra.mxu0 0.0
    %982 = vmatprep.subr.mxu0 0.0
    %983 = vmatpush1.msra.mxu0 0.0
    %984 = vmatprep.subr.mxu0 0.0
    %985 = vmatpush1.msra.mxu0 0.0
    %986 = vmatprep.mubr.f32.mxu0 0.0
    %987 = vmatmul.mubr.f32.gmra.mrb[0].mxu0 %v843
    %v988 = vpop.f32.mrb[0].mxu0
    %v989 = vadd.f32 0.0, %v988
    %v990 = vpop.f32.mrb[0].mxu0
    %v991 = vadd.f32 0.0, %v990
    %992 = vdwg.mxu0
    %v993 = vadd.f32 %v847, %v918
    %v994 = vadd.f32 %v848, %v920
    %v995 = vadd.f32 %v849, %v989
    %v996 = vadd.f32 %v850, %v991
    %v997 = vxor.u32 %v993, 2147483648
    %v998 = vmul.f32 %v997, 1.442695
    %v999 = vpow.pop %v998
    %v1000 = vadd.f32 %v999, 1.0
    %v1001 = vrcp.pop %v1000
    %v1002 = vmul.f32 1.0, %v1001
    %v1003 = vxor.u32 %v994, 2147483648
    %v1004 = vmul.f32 %v1003, 1.442695
    %v1005 = vpow.pop %v1004
    %v1006 = vadd.f32 %v1005, 1.0
    %v1007 = vrcp.pop %v1006
    %v1008 = vmul.f32 1.0, %v1007
    %v1009 = vtanh.pop %v995
    %v1010 = vxor.u32 %v996, 2147483648
    %v1011 = vmul.f32 %v1010, 1.442695
    %v1012 = vpow.pop %v1011
    %v1013 = vadd.f32 %v1012, 1.0
    %v1014 = vrcp.pop %v1013
    %v1015 = vmul.f32 1.0, %v1014
    %v1016 = vmul.f32 %v1008, %v842
    %v1017 = vmul.f32 %v1002, %v1009
    %v1018 = vadd.f32 %v1016, %v1017
    %v1019 = vtanh.pop %v1018
    %v1020 = vmul.f32 %v1015, %v1019
    %s1021 = sadd.s32 %s404, 2
    %v1022 = vstv %s1021
    %vm1023 = vcmp.lt.s32.totalorder %v1022, %v403
    %v1024 = vsel %vm1023, 1, 0
    %1025 = vset.pattern.permute.xlu0 0
    %1026 = vperm.xlu0 %1025, %v1024
    %v1027 = vpop.permute.xlu0 %1026
    %vm1028 = vcmp.eq.s32.totalorder %v1027, 1
    %v1029 = vsel %vm1028, %v1018, %v842
    %v1030 = vsel %vm1028, %v1020, %v843
    %s1031 = smul.u32 3, 4
    %s1032 = smul.addr %s1031, 8
    %s1033 = scalar_lea.vmem [#allocation2], %s1032
    %v1034 = vld [vmem:[%s1033] sm:$0xff]
    %v1035 = vld [vmem:[%s1033 + $0x8] sm:$0xff]
    %v1036 = vld [vmem:[%s1033 + $0x10] sm:$0xff]
    %v1037 = vld [vmem:[%s1033 + $0x18] sm:$0xff]
    %1038 = vmatprep.subr.mxu0 %v415
    %1039 = vmatpush1.msra.mxu0 %v414
    %1040 = vmatprep.subr.mxu0 %v419
    %1041 = vmatpush1.msra.mxu0 %v418
    %1042 = vmatprep.subr.mxu0 %v423
    %1043 = vmatpush1.msra.mxu0 %v422
    %1044 = vmatprep.subr.mxu0 %v427
    %1045 = vmatpush1.msra.mxu0 %v426
    %1046 = vmatprep.subr.mxu0 %v431
    %1047 = vmatpush1.msra.mxu0 %v430
    %1048 = vmatprep.subr.mxu0 %v435
    %1049 = vmatpush1.msra.mxu0 %v434
    %1050 = vmatprep.subr.mxu0 %v439
    %1051 = vmatpush1.msra.mxu0 %v438
    %1052 = vmatprep.subr.mxu0 %v443
    %1053 = vmatpush1.msra.mxu0 %v442
    %1054 = vmatprep.subr.mxu0 %v447
    %1055 = vmatpush1.msra.mxu0 %v446
    %1056 = vmatprep.subr.mxu0 %v451
    %1057 = vmatpush1.msra.mxu0 %v450
    %1058 = vmatprep.subr.mxu0 %v455
    %1059 = vmatpush1.msra.mxu0 %v454
    %1060 = vmatprep.subr.mxu0 %v459
    %1061 = vmatpush1.msra.mxu0 %v458
    %1062 = vmatprep.subr.mxu0 %v463
    %1063 = vmatpush1.msra.mxu0 %v462
    %1064 = vmatprep.subr.mxu0 %v467
    %1065 = vmatpush1.msra.mxu0 %v466
    %1066 = vmatprep.subr.mxu0 %v471
    %1067 = vmatpush1.msra.mxu0 %v470
    %1068 = vmatprep.subr.mxu0 %v475
    %1069 = vmatpush1.msra.mxu0 %v474
    %1070 = vmatprep.subr.mxu0 0.0
    %1071 = vmatpush1.msra.mxu0 0.0
    %1072 = vmatprep.subr.mxu0 0.0
    %1073 = vmatpush1.msra.mxu0 0.0
    %1074 = vmatprep.subr.mxu0 0.0
    %1075 = vmatpush1.msra.mxu0 0.0
    %1076 = vmatprep.subr.mxu0 0.0
    %1077 = vmatpush1.msra.mxu0 0.0
    %1078 = vmatprep.subr.mxu0 0.0
    %1079 = vmatpush1.msra.mxu0 0.0
    %1080 = vmatprep.subr.mxu0 0.0
    %1081 = vmatpush1.msra.mxu0 0.0
    %1082 = vmatprep.subr.mxu0 0.0
    %1083 = vmatpush1.msra.mxu0 0.0
    %1084 = vmatprep.subr.mxu0 0.0
    %1085 = vmatpush1.msra.mxu0 0.0
    %1086 = vmatprep.subr.mxu0 0.0
    %1087 = vmatpush1.msra.mxu0 0.0
    %1088 = vmatprep.subr.mxu0 0.0
    %1089 = vmatpush1.msra.mxu0 0.0
    %1090 = vmatprep.subr.mxu0 0.0
    %1091 = vmatpush1.msra.mxu0 0.0
    %1092 = vmatprep.subr.mxu0 0.0
    %1093 = vmatpush1.msra.mxu0 0.0
    %1094 = vmatprep.subr.mxu0 0.0
    %1095 = vmatpush1.msra.mxu0 0.0
    %1096 = vmatprep.subr.mxu0 0.0
    %1097 = vmatpush1.msra.mxu0 0.0
    %1098 = vmatprep.subr.mxu0 0.0
    %1099 = vmatpush1.msra.mxu0 0.0
    %1100 = vmatprep.subr.mxu0 0.0
    %1101 = vmatpush1.msra.mxu0 0.0
    %1102 = vmatprep.mubr.f32.mxu0 0.0
    %1103 = vmatmul.mubr.f32.gmra.mrb[0].mxu0 %v1030
    %v1104 = vpop.f32.mrb[0].mxu0
    %v1105 = vadd.f32 0.0, %v1104
    %v1106 = vpop.f32.mrb[0].mxu0
    %v1107 = vadd.f32 0.0, %v1106
    %1108 = vdwg.mxu0
    %1109 = vmatprep.subr.mxu0 %v417
    %1110 = vmatpush1.msra.mxu0 %v416
    %1111 = vmatprep.subr.mxu0 %v421
    %1112 = vmatpush1.msra.mxu0 %v420
    %1113 = vmatprep.subr.mxu0 %v425
    %1114 = vmatpush1.msra.mxu0 %v424
    %1115 = vmatprep.subr.mxu0 %v429
    %1116 = vmatpush1.msra.mxu0 %v428
    %1117 = vmatprep.subr.mxu0 %v433
    %1118 = vmatpush1.msra.mxu0 %v432
    %1119 = vmatprep.subr.mxu0 %v437
    %1120 = vmatpush1.msra.mxu0 %v436
    %1121 = vmatprep.subr.mxu0 %v441
    %1122 = vmatpush1.msra.mxu0 %v440
    %1123 = vmatprep.subr.mxu0 %v445
    %1124 = vmatpush1.msra.mxu0 %v444
    %1125 = vmatprep.subr.mxu0 %v449
    %1126 = vmatpush1.msra.mxu0 %v448
    %1127 = vmatprep.subr.mxu0 %v453
    %1128 = vmatpush1.msra.mxu0 %v452
    %1129 = vmatprep.subr.mxu0 %v457
    %1130 = vmatpush1.msra.mxu0 %v456
    %1131 = vmatprep.subr.mxu0 %v461
    %1132 = vmatpush1.msra.mxu0 %v460
    %1133 = vmatprep.subr.mxu0 %v465
    %1134 = vmatpush1.msra.mxu0 %v464
    %1135 = vmatprep.subr.mxu0 %v469
    %1136 = vmatpush1.msra.mxu0 %v468
    %1137 = vmatprep.subr.mxu0 %v473
    %1138 = vmatpush1.msra.mxu0 %v472
    %1139 = vmatprep.subr.mxu0 %v477
    %1140 = vmatpush1.msra.mxu0 %v476
    %1141 = vmatprep.subr.mxu0 0.0
    %1142 = vmatpush1.msra.mxu0 0.0
    %1143 = vmatprep.subr.mxu0 0.0
    %1144 = vmatpush1.msra.mxu0 0.0
    %1145 = vmatprep.subr.mxu0 0.0
    %1146 = vmatpush1.msra.mxu0 0.0
    %1147 = vmatprep.subr.mxu0 0.0
    %1148 = vmatpush1.msra.mxu0 0.0
    %1149 = vmatprep.subr.mxu0 0.0
    %1150 = vmatpush1.msra.mxu0 0.0
    %1151 = vmatprep.subr.mxu0 0.0
    %1152 = vmatpush1.msra.mxu0 0.0
    %1153 = vmatprep.subr.mxu0 0.0
    %1154 = vmatpush1.msra.mxu0 0.0
    %1155 = vmatprep.subr.mxu0 0.0
    %1156 = vmatpush1.msra.mxu0 0.0
    %1157 = vmatprep.subr.mxu0 0.0
    %1158 = vmatpush1.msra.mxu0 0.0
    %1159 = vmatprep.subr.mxu0 0.0
    %1160 = vmatpush1.msra.mxu0 0.0
    %1161 = vmatprep.subr.mxu0 0.0
    %1162 = vmatpush1.msra.mxu0 0.0
    %1163 = vmatprep.subr.mxu0 0.0
    %1164 = vmatpush1.msra.mxu0 0.0
    %1165 = vmatprep.subr.mxu0 0.0
    %1166 = vmatpush1.msra.mxu0 0.0
    %1167 = vmatprep.subr.mxu0 0.0
    %1168 = vmatpush1.msra.mxu0 0.0
    %1169 = vmatprep.subr.mxu0 0.0
    %1170 = vmatpush1.msra.mxu0 0.0
    %1171 = vmatprep.subr.mxu0 0.0
    %1172 = vmatpush1.msra.mxu0 0.0
    %1173 = vmatprep.mubr.f32.mxu0 0.0
    %1174 = vmatmul.mubr.f32.gmra.mrb[0].mxu0 %v1030
    %v1175 = vpop.f32.mrb[0].mxu0
    %v1176 = vadd.f32 0.0, %v1175
    %v1177 = vpop.f32.mrb[0].mxu0
    %v1178 = vadd.f32 0.0, %v1177
    %1179 = vdwg.mxu0
    %v1180 = vadd.f32 %v1034, %v1105
    %v1181 = vadd.f32 %v1035, %v1107
    %v1182 = vadd.f32 %v1036, %v1176
    %v1183 = vadd.f32 %v1037, %v1178
    %v1184 = vxor.u32 %v1180, 2147483648
    %v1185 = vmul.f32 %v1184, 1.442695
    %v1186 = vpow.pop %v1185
    %v1187 = vadd.f32 %v1186, 1.0
    %v1188 = vrcp.pop %v1187
    %v1189 = vmul.f32 1.0, %v1188
    %v1190 = vxor.u32 %v1181, 2147483648
    %v1191 = vmul.f32 %v1190, 1.442695
    %v1192 = vpow.pop %v1191
    %v1193 = vadd.f32 %v1192, 1.0
    %v1194 = vrcp.pop %v1193
    %v1195 = vmul.f32 1.0, %v1194
    %v1196 = vtanh.pop %v1182
    %v1197 = vxor.u32 %v1183, 2147483648
    %v1198 = vmul.f32 %v1197, 1.442695
    %v1199 = vpow.pop %v1198
    %v1200 = vadd.f32 %v1199, 1.0
    %v1201 = vrcp.pop %v1200
    %v1202 = vmul.f32 1.0, %v1201
    %v1203 = vmul.f32 %v1195, %v1029
    %v1204 = vmul.f32 %v1189, %v1196
    %v1205 = vadd.f32 %v1203, %v1204
    %v1206 = vtanh.pop %v1205
    %v1207 = vmul.f32 %v1202, %v1206
    %s1208 = sadd.s32 %s404, 3
    %v1209 = vstv %s1208
    %vm1210 = vcmp.lt.s32.totalorder %v1209, %v403
    %v1211 = vsel %vm1210, 1, 0
    %1212 = vset.pattern.permute.xlu0 0
    %1213 = vperm.xlu0 %1212, %v1211
    %v1214 = vpop.permute.xlu0 %1213
    %vm1215 = vcmp.eq.s32.totalorder %v1214, 1
    %v1216 = vsel %vm1215, %v1205, %v1029
    %v1217 = vsel %vm1215, %v1207, %v1030
    %s1218 = smul.u32 4, 4
    %s1219 = smul.addr %s1218, 8
    %s1220 = scalar_lea.vmem [#allocation2], %s1219
    %v1221 = vld [vmem:[%s1220] sm:$0xff]
    %v1222 = vld [vmem:[%s1220 + $0x8] sm:$0xff]
    %v1223 = vld [vmem:[%s1220 + $0x10] sm:$0xff]
    %v1224 = vld [vmem:[%s1220 + $0x18] sm:$0xff]
    %1225 = vmatprep.subr.mxu0 %v415
    %1226 = vmatpush1.msra.mxu0 %v414
    %1227 = vmatprep.subr.mxu0 %v419
    %1228 = vmatpush1.msra.mxu0 %v418
    %1229 = vmatprep.subr.mxu0 %v423
    %1230 = vmatpush1.msra.mxu0 %v422
    %1231 = vmatprep.subr.mxu0 %v427
    %1232 = vmatpush1.msra.mxu0 %v426
    %1233 = vmatprep.subr.mxu0 %v431
    %1234 = vmatpush1.msra.mxu0 %v430
    %1235 = vmatprep.subr.mxu0 %v435
    %1236 = vmatpush1.msra.mxu0 %v434
    %1237 = vmatprep.subr.mxu0 %v439
    %1238 = vmatpush1.msra.mxu0 %v438
    %1239 = vmatprep.subr.mxu0 %v443
    %1240 = vmatpush1.msra.mxu0 %v442
    %1241 = vmatprep.subr.mxu0 %v447
    %1242 = vmatpush1.msra.mxu0 %v446
    %1243 = vmatprep.subr.mxu0 %v451
    %1244 = vmatpush1.msra.mxu0 %v450
    %1245 = vmatprep.subr.mxu0 %v455
    %1246 = vmatpush1.msra.mxu0 %v454
    %1247 = vmatprep.subr.mxu0 %v459
    %1248 = vmatpush1.msra.mxu0 %v458
    %1249 = vmatprep.subr.mxu0 %v463
    %1250 = vmatpush1.msra.mxu0 %v462
    %1251 = vmatprep.subr.mxu0 %v467
    %1252 = vmatpush1.msra.mxu0 %v466
    %1253 = vmatprep.subr.mxu0 %v471
    %1254 = vmatpush1.msra.mxu0 %v470
    %1255 = vmatprep.subr.mxu0 %v475
    %1256 = vmatpush1.msra.mxu0 %v474
    %1257 = vmatprep.subr.mxu0 0.0
    %1258 = vmatpush1.msra.mxu0 0.0
    %1259 = vmatprep.subr.mxu0 0.0
    %1260 = vmatpush1.msra.mxu0 0.0
    %1261 = vmatprep.subr.mxu0 0.0
    %1262 = vmatpush1.msra.mxu0 0.0
    %1263 = vmatprep.subr.mxu0 0.0
    %1264 = vmatpush1.msra.mxu0 0.0
    %1265 = vmatprep.subr.mxu0 0.0
    %1266 = vmatpush1.msra.mxu0 0.0
    %1267 = vmatprep.subr.mxu0 0.0
    %1268 = vmatpush1.msra.mxu0 0.0
    %1269 = vmatprep.subr.mxu0 0.0
    %1270 = vmatpush1.msra.mxu0 0.0
    %1271 = vmatprep.subr.mxu0 0.0
    %1272 = vmatpush1.msra.mxu0 0.0
    %1273 = vmatprep.subr.mxu0 0.0
    %1274 = vmatpush1.msra.mxu0 0.0
    %1275 = vmatprep.subr.mxu0 0.0
    %1276 = vmatpush1.msra.mxu0 0.0
    %1277 = vmatprep.subr.mxu0 0.0
    %1278 = vmatpush1.msra.mxu0 0.0
    %1279 = vmatprep.subr.mxu0 0.0
    %1280 = vmatpush1.msra.mxu0 0.0
    %1281 = vmatprep.subr.mxu0 0.0
    %1282 = vmatpush1.msra.mxu0 0.0
    %1283 = vmatprep.subr.mxu0 0.0
    %1284 = vmatpush1.msra.mxu0 0.0
    %1285 = vmatprep.subr.mxu0 0.0
    %1286 = vmatpush1.msra.mxu0 0.0
    %1287 = vmatprep.subr.mxu0 0.0
    %1288 = vmatpush1.msra.mxu0 0.0
    %1289 = vmatprep.mubr.f32.mxu0 0.0
    %1290 = vmatmul.mubr.f32.gmra.mrb[0].mxu0 %v1217
    %v1291 = vpop.f32.mrb[0].mxu0
    %v1292 = vadd.f32 0.0, %v1291
    %v1293 = vpop.f32.mrb[0].mxu0
    %v1294 = vadd.f32 0.0, %v1293
    %1295 = vdwg.mxu0
    %1296 = vmatprep.subr.mxu0 %v417
    %1297 = vmatpush1.msra.mxu0 %v416
    %1298 = vmatprep.subr.mxu0 %v421
    %1299 = vmatpush1.msra.mxu0 %v420
    %1300 = vmatprep.subr.mxu0 %v425
    %1301 = vmatpush1.msra.mxu0 %v424
    %1302 = vmatprep.subr.mxu0 %v429
    %1303 = vmatpush1.msra.mxu0 %v428
    %1304 = vmatprep.subr.mxu0 %v433
    %1305 = vmatpush1.msra.mxu0 %v432
    %1306 = vmatprep.subr.mxu0 %v437
    %1307 = vmatpush1.msra.mxu0 %v436
    %1308 = vmatprep.subr.mxu0 %v441
    %1309 = vmatpush1.msra.mxu0 %v440
    %1310 = vmatprep.subr.mxu0 %v445
    %1311 = vmatpush1.msra.mxu0 %v444
    %1312 = vmatprep.subr.mxu0 %v449
    %1313 = vmatpush1.msra.mxu0 %v448
    %1314 = vmatprep.subr.mxu0 %v453
    %1315 = vmatpush1.msra.mxu0 %v452
    %1316 = vmatprep.subr.mxu0 %v457
    %1317 = vmatpush1.msra.mxu0 %v456
    %1318 = vmatprep.subr.mxu0 %v461
    %1319 = vmatpush1.msra.mxu0 %v460
    %1320 = vmatprep.subr.mxu0 %v465
    %1321 = vmatpush1.msra.mxu0 %v464
    %1322 = vmatprep.subr.mxu0 %v469
    %1323 = vmatpush1.msra.mxu0 %v468
    %1324 = vmatprep.subr.mxu0 %v473
    %1325 = vmatpush1.msra.mxu0 %v472
    %1326 = vmatprep.subr.mxu0 %v477
    %1327 = vmatpush1.msra.mxu0 %v476
    %1328 = vmatprep.subr.mxu0 0.0
    %1329 = vmatpush1.msra.mxu0 0.0
    %1330 = vmatprep.subr.mxu0 0.0
    %1331 = vmatpush1.msra.mxu0 0.0
    %1332 = vmatprep.subr.mxu0 0.0
    %1333 = vmatpush1.msra.mxu0 0.0
    %1334 = vmatprep.subr.mxu0 0.0
    %1335 = vmatpush1.msra.mxu0 0.0
    %1336 = vmatprep.subr.mxu0 0.0
    %1337 = vmatpush1.msra.mxu0 0.0
    %1338 = vmatprep.subr.mxu0 0.0
    %1339 = vmatpush1.msra.mxu0 0.0
    %1340 = vmatprep.subr.mxu0 0.0
    %1341 = vmatpush1.msra.mxu0 0.0
    %1342 = vmatprep.subr.mxu0 0.0
    %1343 = vmatpush1.msra.mxu0 0.0
    %1344 = vmatprep.subr.mxu0 0.0
    %1345 = vmatpush1.msra.mxu0 0.0
    %1346 = vmatprep.subr.mxu0 0.0
    %1347 = vmatpush1.msra.mxu0 0.0
    %1348 = vmatprep.subr.mxu0 0.0
    %1349 = vmatpush1.msra.mxu0 0.0
    %1350 = vmatprep.subr.mxu0 0.0
    %1351 = vmatpush1.msra.mxu0 0.0
    %1352 = vmatprep.subr.mxu0 0.0
    %1353 = vmatpush1.msra.mxu0 0.0
    %1354 = vmatprep.subr.mxu0 0.0
    %1355 = vmatpush1.msra.mxu0 0.0
    %1356 = vmatprep.subr.mxu0 0.0
    %1357 = vmatpush1.msra.mxu0 0.0
    %1358 = vmatprep.subr.mxu0 0.0
    %1359 = vmatpush1.msra.mxu0 0.0
    %1360 = vmatprep.mubr.f32.mxu0 0.0
    %1361 = vmatmul.mubr.f32.gmra.mrb[0].mxu0 %v1217
    %v1362 = vpop.f32.mrb[0].mxu0
    %v1363 = vadd.f32 0.0, %v1362
    %v1364 = vpop.f32.mrb[0].mxu0
    %v1365 = vadd.f32 0.0, %v1364
    %1366 = vdwg.mxu0
    %v1367 = vadd.f32 %v1221, %v1292
    %v1368 = vadd.f32 %v1222, %v1294
    %v1369 = vadd.f32 %v1223, %v1363
    %v1370 = vadd.f32 %v1224, %v1365
    %v1371 = vxor.u32 %v1367, 2147483648
    %v1372 = vmul.f32 %v1371, 1.442695
    %v1373 = vpow.pop %v1372
    %v1374 = vadd.f32 %v1373, 1.0
    %v1375 = vrcp.pop %v1374
    %v1376 = vmul.f32 1.0, %v1375
    %v1377 = vxor.u32 %v1368, 2147483648
    %v1378 = vmul.f32 %v1377, 1.442695
    %v1379 = vpow.pop %v1378
    %v1380 = vadd.f32 %v1379, 1.0
    %v1381 = vrcp.pop %v1380
    %v1382 = vmul.f32 1.0, %v1381
    %v1383 = vtanh.pop %v1369
    %v1384 = vxor.u32 %v1370, 2147483648
    %v1385 = vmul.f32 %v1384, 1.442695
    %v1386 = vpow.pop %v1385
    %v1387 = vadd.f32 %v1386, 1.0
    %v1388 = vrcp.pop %v1387
    %v1389 = vmul.f32 1.0, %v1388
    %v1390 = vmul.f32 %v1382, %v1216
    %v1391 = vmul.f32 %v1376, %v1383
    %v1392 = vadd.f32 %v1390, %v1391
    %v1393 = vtanh.pop %v1392
    %v1394 = vmul.f32 %v1389, %v1393
    %s1395 = sadd.s32 %s404, 4
    %v1396 = vstv %s1395
    %vm1397 = vcmp.lt.s32.totalorder %v1396, %v403
    %v1398 = vsel %vm1397, 1, 0
    %1399 = vset.pattern.permute.xlu0 0
    %1400 = vperm.xlu0 %1399, %v1398
    %v1401 = vpop.permute.xlu0 %1400
    %vm1402 = vcmp.eq.s32.totalorder %v1401, 1
    %v1403 = vsel %vm1402, %v1392, %v1216
    %v1404 = vsel %vm1402, %v1394, %v1217
    %s1405 = smul.u32 5, 4
    %s1406 = smul.addr %s1405, 8
    %s1407 = scalar_lea.vmem [#allocation2], %s1406
    %v1408 = vld [vmem:[%s1407] sm:$0xff]
    %v1409 = vld [vmem:[%s1407 + $0x8] sm:$0xff]
    %v1410 = vld [vmem:[%s1407 + $0x10] sm:$0xff]
    %v1411 = vld [vmem:[%s1407 + $0x18] sm:$0xff]
    %1412 = vmatprep.subr.mxu0 %v415
    %1413 = vmatpush1.msra.mxu0 %v414
    %1414 = vmatprep.subr.mxu0 %v419
    %1415 = vmatpush1.msra.mxu0 %v418
    %1416 = vmatprep.subr.mxu0 %v423
    %1417 = vmatpush1.msra.mxu0 %v422
    %1418 = vmatprep.subr.mxu0 %v427
    %1419 = vmatpush1.msra.mxu0 %v426
    %1420 = vmatprep.subr.mxu0 %v431
    %1421 = vmatpush1.msra.mxu0 %v430
    %1422 = vmatprep.subr.mxu0 %v435
    %1423 = vmatpush1.msra.mxu0 %v434
    %1424 = vmatprep.subr.mxu0 %v439
    %1425 = vmatpush1.msra.mxu0 %v438
    %1426 = vmatprep.subr.mxu0 %v443
    %1427 = vmatpush1.msra.mxu0 %v442
    %1428 = vmatprep.subr.mxu0 %v447
    %1429 = vmatpush1.msra.mxu0 %v446
    %1430 = vmatprep.subr.mxu0 %v451
    %1431 = vmatpush1.msra.mxu0 %v450
    %1432 = vmatprep.subr.mxu0 %v455
    %1433 = vmatpush1.msra.mxu0 %v454
    %1434 = vmatprep.subr.mxu0 %v459
    %1435 = vmatpush1.msra.mxu0 %v458
    %1436 = vmatprep.subr.mxu0 %v463
    %1437 = vmatpush1.msra.mxu0 %v462
    %1438 = vmatprep.subr.mxu0 %v467
    %1439 = vmatpush1.msra.mxu0 %v466
    %1440 = vmatprep.subr.mxu0 %v471
    %1441 = vmatpush1.msra.mxu0 %v470
    %1442 = vmatprep.subr.mxu0 %v475
    %1443 = vmatpush1.msra.mxu0 %v474
    %1444 = vmatprep.subr.mxu0 0.0
    %1445 = vmatpush1.msra.mxu0 0.0
    %1446 = vmatprep.subr.mxu0 0.0
    %1447 = vmatpush1.msra.mxu0 0.0
    %1448 = vmatprep.subr.mxu0 0.0
    %1449 = vmatpush1.msra.mxu0 0.0
    %1450 = vmatprep.subr.mxu0 0.0
    %1451 = vmatpush1.msra.mxu0 0.0
    %1452 = vmatprep.subr.mxu0 0.0
    %1453 = vmatpush1.msra.mxu0 0.0
    %1454 = vmatprep.subr.mxu0 0.0
    %1455 = vmatpush1.msra.mxu0 0.0
    %1456 = vmatprep.subr.mxu0 0.0
    %1457 = vmatpush1.msra.mxu0 0.0
    %1458 = vmatprep.subr.mxu0 0.0
    %1459 = vmatpush1.msra.mxu0 0.0
    %1460 = vmatprep.subr.mxu0 0.0
    %1461 = vmatpush1.msra.mxu0 0.0
    %1462 = vmatprep.subr.mxu0 0.0
    %1463 = vmatpush1.msra.mxu0 0.0
    %1464 = vmatprep.subr.mxu0 0.0
    %1465 = vmatpush1.msra.mxu0 0.0
    %1466 = vmatprep.subr.mxu0 0.0
    %1467 = vmatpush1.msra.mxu0 0.0
    %1468 = vmatprep.subr.mxu0 0.0
    %1469 = vmatpush1.msra.mxu0 0.0
    %1470 = vmatprep.subr.mxu0 0.0
    %1471 = vmatpush1.msra.mxu0 0.0
    %1472 = vmatprep.subr.mxu0 0.0
    %1473 = vmatpush1.msra.mxu0 0.0
    %1474 = vmatprep.subr.mxu0 0.0
    %1475 = vmatpush1.msra.mxu0 0.0
    %1476 = vmatprep.mubr.f32.mxu0 0.0
    %1477 = vmatmul.mubr.f32.gmra.mrb[0].mxu0 %v1404
    %v1478 = vpop.f32.mrb[0].mxu0
    %v1479 = vadd.f32 0.0, %v1478
    %v1480 = vpop.f32.mrb[0].mxu0
    %v1481 = vadd.f32 0.0, %v1480
    %1482 = vdwg.mxu0
    %1483 = vmatprep.subr.mxu0 %v417
    %1484 = vmatpush1.msra.mxu0 %v416
    %1485 = vmatprep.subr.mxu0 %v421
    %1486 = vmatpush1.msra.mxu0 %v420
    %1487 = vmatprep.subr.mxu0 %v425
    %1488 = vmatpush1.msra.mxu0 %v424
    %1489 = vmatprep.subr.mxu0 %v429
    %1490 = vmatpush1.msra.mxu0 %v428
    %1491 = vmatprep.subr.mxu0 %v433
    %1492 = vmatpush1.msra.mxu0 %v432
    %1493 = vmatprep.subr.mxu0 %v437
    %1494 = vmatpush1.msra.mxu0 %v436
    %1495 = vmatprep.subr.mxu0 %v441
    %1496 = vmatpush1.msra.mxu0 %v440
    %1497 = vmatprep.subr.mxu0 %v445
    %1498 = vmatpush1.msra.mxu0 %v444
    %1499 = vmatprep.subr.mxu0 %v449
    %1500 = vmatpush1.msra.mxu0 %v448
    %1501 = vmatprep.subr.mxu0 %v453
    %1502 = vmatpush1.msra.mxu0 %v452
    %1503 = vmatprep.subr.mxu0 %v457
    %1504 = vmatpush1.msra.mxu0 %v456
    %1505 = vmatprep.subr.mxu0 %v461
    %1506 = vmatpush1.msra.mxu0 %v460
    %1507 = vmatprep.subr.mxu0 %v465
    %1508 = vmatpush1.msra.mxu0 %v464
    %1509 = vmatprep.subr.mxu0 %v469
    %1510 = vmatpush1.msra.mxu0 %v468
    %1511 = vmatprep.subr.mxu0 %v473
    %1512 = vmatpush1.msra.mxu0 %v472
    %1513 = vmatprep.subr.mxu0 %v477
    %1514 = vmatpush1.msra.mxu0 %v476
    %1515 = vmatprep.subr.mxu0 0.0
    %1516 = vmatpush1.msra.mxu0 0.0
    %1517 = vmatprep.subr.mxu0 0.0
    %1518 = vmatpush1.msra.mxu0 0.0
    %1519 = vmatprep.subr.mxu0 0.0
    %1520 = vmatpush1.msra.mxu0 0.0
    %1521 = vmatprep.subr.mxu0 0.0
    %1522 = vmatpush1.msra.mxu0 0.0
    %1523 = vmatprep.subr.mxu0 0.0
    %1524 = vmatpush1.msra.mxu0 0.0
    %1525 = vmatprep.subr.mxu0 0.0
    %1526 = vmatpush1.msra.mxu0 0.0
    %1527 = vmatprep.subr.mxu0 0.0
    %1528 = vmatpush1.msra.mxu0 0.0
    %1529 = vmatprep.subr.mxu0 0.0
    %1530 = vmatpush1.msra.mxu0 0.0
    %1531 = vmatprep.subr.mxu0 0.0
    %1532 = vmatpush1.msra.mxu0 0.0
    %1533 = vmatprep.subr.mxu0 0.0
    %1534 = vmatpush1.msra.mxu0 0.0
    %1535 = vmatprep.subr.mxu0 0.0
    %1536 = vmatpush1.msra.mxu0 0.0
    %1537 = vmatprep.subr.mxu0 0.0
    %1538 = vmatpush1.msra.mxu0 0.0
    %1539 = vmatprep.subr.mxu0 0.0
    %1540 = vmatpush1.msra.mxu0 0.0
    %1541 = vmatprep.subr.mxu0 0.0
    %1542 = vmatpush1.msra.mxu0 0.0
    %1543 = vmatprep.subr.mxu0 0.0
    %1544 = vmatpush1.msra.mxu0 0.0
    %1545 = vmatprep.subr.mxu0 0.0
    %1546 = vmatpush1.msra.mxu0 0.0
    %1547 = vmatprep.mubr.f32.mxu0 0.0
    %1548 = vmatmul.mubr.f32.gmra.mrb[0].mxu0 %v1404
    %v1549 = vpop.f32.mrb[0].mxu0
    %v1550 = vadd.f32 0.0, %v1549
    %v1551 = vpop.f32.mrb[0].mxu0
    %v1552 = vadd.f32 0.0, %v1551
    %1553 = vdwg.mxu0
    %v1554 = vadd.f32 %v1408, %v1479
    %v1555 = vadd.f32 %v1409, %v1481
    %v1556 = vadd.f32 %v1410, %v1550
    %v1557 = vadd.f32 %v1411, %v1552
    %v1558 = vxor.u32 %v1554, 2147483648
    %v1559 = vmul.f32 %v1558, 1.442695
    %v1560 = vpow.pop %v1559
    %v1561 = vadd.f32 %v1560, 1.0
    %v1562 = vrcp.pop %v1561
    %v1563 = vmul.f32 1.0, %v1562
    %v1564 = vxor.u32 %v1555, 2147483648
    %v1565 = vmul.f32 %v1564, 1.442695
    %v1566 = vpow.pop %v1565
    %v1567 = vadd.f32 %v1566, 1.0
    %v1568 = vrcp.pop %v1567
    %v1569 = vmul.f32 1.0, %v1568
    %v1570 = vtanh.pop %v1556
    %v1571 = vxor.u32 %v1557, 2147483648
    %v1572 = vmul.f32 %v1571, 1.442695
    %v1573 = vpow.pop %v1572
    %v1574 = vadd.f32 %v1573, 1.0
    %v1575 = vrcp.pop %v1574
    %v1576 = vmul.f32 1.0, %v1575
    %v1577 = vmul.f32 %v1569, %v1403
    %v1578 = vmul.f32 %v1563, %v1570
    %v1579 = vadd.f32 %v1577, %v1578
    %v1580 = vtanh.pop %v1579
    %v1581 = vmul.f32 %v1576, %v1580
    %s1582 = sadd.s32 %s404, 5
    %v1583 = vstv %s1582
    %vm1584 = vcmp.lt.s32.totalorder %v1583, %v403
    %v1585 = vsel %vm1584, 1, 0
    %1586 = vset.pattern.permute.xlu0 0
    %1587 = vperm.xlu0 %1586, %v1585
    %v1588 = vpop.permute.xlu0 %1587
    %vm1589 = vcmp.eq.s32.totalorder %v1588, 1
    %v1590 = vsel %vm1589, %v1579, %v1403
    %v1591 = vsel %vm1589, %v1581, %v1404
    %s1592 = smul.u32 6, 4
    %s1593 = smul.addr %s1592, 8
    %s1594 = scalar_lea.vmem [#allocation2], %s1593
    %v1595 = vld [vmem:[%s1594] sm:$0xff]
    %v1596 = vld [vmem:[%s1594 + $0x8] sm:$0xff]
    %v1597 = vld [vmem:[%s1594 + $0x10] sm:$0xff]
    %v1598 = vld [vmem:[%s1594 + $0x18] sm:$0xff]
    %1599 = vmatprep.subr.mxu0 %v415
    %1600 = vmatpush1.msra.mxu0 %v414
    %1601 = vmatprep.subr.mxu0 %v419
    %1602 = vmatpush1.msra.mxu0 %v418
    %1603 = vmatprep.subr.mxu0 %v423
    %1604 = vmatpush1.msra.mxu0 %v422
    %1605 = vmatprep.subr.mxu0 %v427
    %1606 = vmatpush1.msra.mxu0 %v426
    %1607 = vmatprep.subr.mxu0 %v431
    %1608 = vmatpush1.msra.mxu0 %v430
    %1609 = vmatprep.subr.mxu0 %v435
    %1610 = vmatpush1.msra.mxu0 %v434
    %1611 = vmatprep.subr.mxu0 %v439
    %1612 = vmatpush1.msra.mxu0 %v438
    %1613 = vmatprep.subr.mxu0 %v443
    %1614 = vmatpush1.msra.mxu0 %v442
    %1615 = vmatprep.subr.mxu0 %v447
    %1616 = vmatpush1.msra.mxu0 %v446
    %1617 = vmatprep.subr.mxu0 %v451
    %1618 = vmatpush1.msra.mxu0 %v450
    %1619 = vmatprep.subr.mxu0 %v455
    %1620 = vmatpush1.msra.mxu0 %v454
    %1621 = vmatprep.subr.mxu0 %v459
    %1622 = vmatpush1.msra.mxu0 %v458
    %1623 = vmatprep.subr.mxu0 %v463
    %1624 = vmatpush1.msra.mxu0 %v462
    %1625 = vmatprep.subr.mxu0 %v467
    %1626 = vmatpush1.msra.mxu0 %v466
    %1627 = vmatprep.subr.mxu0 %v471
    %1628 = vmatpush1.msra.mxu0 %v470
    %1629 = vmatprep.subr.mxu0 %v475
    %1630 = vmatpush1.msra.mxu0 %v474
    %1631 = vmatprep.subr.mxu0 0.0
    %1632 = vmatpush1.msra.mxu0 0.0
    %1633 = vmatprep.subr.mxu0 0.0
    %1634 = vmatpush1.msra.mxu0 0.0
    %1635 = vmatprep.subr.mxu0 0.0
    %1636 = vmatpush1.msra.mxu0 0.0
    %1637 = vmatprep.subr.mxu0 0.0
    %1638 = vmatpush1.msra.mxu0 0.0
    %1639 = vmatprep.subr.mxu0 0.0
    %1640 = vmatpush1.msra.mxu0 0.0
    %1641 = vmatprep.subr.mxu0 0.0
    %1642 = vmatpush1.msra.mxu0 0.0
    %1643 = vmatprep.subr.mxu0 0.0
    %1644 = vmatpush1.msra.mxu0 0.0
    %1645 = vmatprep.subr.mxu0 0.0
    %1646 = vmatpush1.msra.mxu0 0.0
    %1647 = vmatprep.subr.mxu0 0.0
    %1648 = vmatpush1.msra.mxu0 0.0
    %1649 = vmatprep.subr.mxu0 0.0
    %1650 = vmatpush1.msra.mxu0 0.0
    %1651 = vmatprep.subr.mxu0 0.0
    %1652 = vmatpush1.msra.mxu0 0.0
    %1653 = vmatprep.subr.mxu0 0.0
    %1654 = vmatpush1.msra.mxu0 0.0
    %1655 = vmatprep.subr.mxu0 0.0
    %1656 = vmatpush1.msra.mxu0 0.0
    %1657 = vmatprep.subr.mxu0 0.0
    %1658 = vmatpush1.msra.mxu0 0.0
    %1659 = vmatprep.subr.mxu0 0.0
    %1660 = vmatpush1.msra.mxu0 0.0
    %1661 = vmatprep.subr.mxu0 0.0
    %1662 = vmatpush1.msra.mxu0 0.0
    %1663 = vmatprep.mubr.f32.mxu0 0.0
    %1664 = vmatmul.mubr.f32.gmra.mrb[0].mxu0 %v1591
    %v1665 = vpop.f32.mrb[0].mxu0
    %v1666 = vadd.f32 0.0, %v1665
    %v1667 = vpop.f32.mrb[0].mxu0
    %v1668 = vadd.f32 0.0, %v1667
    %1669 = vdwg.mxu0
    %1670 = vmatprep.subr.mxu0 %v417
    %1671 = vmatpush1.msra.mxu0 %v416
    %1672 = vmatprep.subr.mxu0 %v421
    %1673 = vmatpush1.msra.mxu0 %v420
    %1674 = vmatprep.subr.mxu0 %v425
    %1675 = vmatpush1.msra.mxu0 %v424
    %1676 = vmatprep.subr.mxu0 %v429
    %1677 = vmatpush1.msra.mxu0 %v428
    %1678 = vmatprep.subr.mxu0 %v433
    %1679 = vmatpush1.msra.mxu0 %v432
    %1680 = vmatprep.subr.mxu0 %v437
    %1681 = vmatpush1.msra.mxu0 %v436
    %1682 = vmatprep.subr.mxu0 %v441
    %1683 = vmatpush1.msra.mxu0 %v440
    %1684 = vmatprep.subr.mxu0 %v445
    %1685 = vmatpush1.msra.mxu0 %v444
    %1686 = vmatprep.subr.mxu0 %v449
    %1687 = vmatpush1.msra.mxu0 %v448
    %1688 = vmatprep.subr.mxu0 %v453
    %1689 = vmatpush1.msra.mxu0 %v452
    %1690 = vmatprep.subr.mxu0 %v457
    %1691 = vmatpush1.msra.mxu0 %v456
    %1692 = vmatprep.subr.mxu0 %v461
    %1693 = vmatpush1.msra.mxu0 %v460
    %1694 = vmatprep.subr.mxu0 %v465
    %1695 = vmatpush1.msra.mxu0 %v464
    %1696 = vmatprep.subr.mxu0 %v469
    %1697 = vmatpush1.msra.mxu0 %v468
    %1698 = vmatprep.subr.mxu0 %v473
    %1699 = vmatpush1.msra.mxu0 %v472
    %1700 = vmatprep.subr.mxu0 %v477
    %1701 = vmatpush1.msra.mxu0 %v476
    %1702 = vmatprep.subr.mxu0 0.0
    %1703 = vmatpush1.msra.mxu0 0.0
    %1704 = vmatprep.subr.mxu0 0.0
    %1705 = vmatpush1.msra.mxu0 0.0
    %1706 = vmatprep.subr.mxu0 0.0
    %1707 = vmatpush1.msra.mxu0 0.0
    %1708 = vmatprep.subr.mxu0 0.0
    %1709 = vmatpush1.msra.mxu0 0.0
    %1710 = vmatprep.subr.mxu0 0.0
    %1711 = vmatpush1.msra.mxu0 0.0
    %1712 = vmatprep.subr.mxu0 0.0
    %1713 = vmatpush1.msra.mxu0 0.0
    %1714 = vmatprep.subr.mxu0 0.0
    %1715 = vmatpush1.msra.mxu0 0.0
    %1716 = vmatprep.subr.mxu0 0.0
    %1717 = vmatpush1.msra.mxu0 0.0
    %1718 = vmatprep.subr.mxu0 0.0
    %1719 = vmatpush1.msra.mxu0 0.0
    %1720 = vmatprep.subr.mxu0 0.0
    %1721 = vmatpush1.msra.mxu0 0.0
    %1722 = vmatprep.subr.mxu0 0.0
    %1723 = vmatpush1.msra.mxu0 0.0
    %1724 = vmatprep.subr.mxu0 0.0
    %1725 = vmatpush1.msra.mxu0 0.0
    %1726 = vmatprep.subr.mxu0 0.0
    %1727 = vmatpush1.msra.mxu0 0.0
    %1728 = vmatprep.subr.mxu0 0.0
    %1729 = vmatpush1.msra.mxu0 0.0
    %1730 = vmatprep.subr.mxu0 0.0
    %1731 = vmatpush1.msra.mxu0 0.0
    %1732 = vmatprep.subr.mxu0 0.0
    %1733 = vmatpush1.msra.mxu0 0.0
    %1734 = vmatprep.mubr.f32.mxu0 0.0
    %1735 = vmatmul.mubr.f32.gmra.mrb[0].mxu0 %v1591
    %v1736 = vpop.f32.mrb[0].mxu0
    %v1737 = vadd.f32 0.0, %v1736
    %v1738 = vpop.f32.mrb[0].mxu0
    %v1739 = vadd.f32 0.0, %v1738
    %1740 = vdwg.mxu0
    %v1741 = vadd.f32 %v1595, %v1666
    %v1742 = vadd.f32 %v1596, %v1668
    %v1743 = vadd.f32 %v1597, %v1737
    %v1744 = vadd.f32 %v1598, %v1739
    %v1745 = vxor.u32 %v1741, 2147483648
    %v1746 = vmul.f32 %v1745, 1.442695
    %v1747 = vpow.pop %v1746
    %v1748 = vadd.f32 %v1747, 1.0
    %v1749 = vrcp.pop %v1748
    %v1750 = vmul.f32 1.0, %v1749
    %v1751 = vxor.u32 %v1742, 2147483648
    %v1752 = vmul.f32 %v1751, 1.442695
    %v1753 = vpow.pop %v1752
    %v1754 = vadd.f32 %v1753, 1.0
    %v1755 = vrcp.pop %v1754
    %v1756 = vmul.f32 1.0, %v1755
    %v1757 = vtanh.pop %v1743
    %v1758 = vxor.u32 %v1744, 2147483648
    %v1759 = vmul.f32 %v1758, 1.442695
    %v1760 = vpow.pop %v1759
    %v1761 = vadd.f32 %v1760, 1.0
    %v1762 = vrcp.pop %v1761
    %v1763 = vmul.f32 1.0, %v1762
    %v1764 = vmul.f32 %v1756, %v1590
    %v1765 = vmul.f32 %v1750, %v1757
    %v1766 = vadd.f32 %v1764, %v1765
    %v1767 = vtanh.pop %v1766
    %v1768 = vmul.f32 %v1763, %v1767
    %s1769 = sadd.s32 %s404, 6
    %v1770 = vstv %s1769
    %vm1771 = vcmp.lt.s32.totalorder %v1770, %v403
    %v1772 = vsel %vm1771, 1, 0
    %1773 = vset.pattern.permute.xlu0 0
    %1774 = vperm.xlu0 %1773, %v1772
    %v1775 = vpop.permute.xlu0 %1774
    %vm1776 = vcmp.eq.s32.totalorder %v1775, 1
    %v1777 = vsel %vm1776, %v1766, %v1590
    %v1778 = vsel %vm1776, %v1768, %v1591
    %s1779 = smul.u32 7, 4
    %s1780 = smul.addr %s1779, 8
    %s1781 = scalar_lea.vmem [#allocation2], %s1780
    %v1782 = vld [vmem:[%s1781] sm:$0xff]
    %v1783 = vld [vmem:[%s1781 + $0x8] sm:$0xff]
    %v1784 = vld [vmem:[%s1781 + $0x10] sm:$0xff]
    %v1785 = vld [vmem:[%s1781 + $0x18] sm:$0xff]
    %1786 = vmatprep.subr.mxu0 %v415
    %1787 = vmatpush1.msra.mxu0 %v414
    %1788 = vmatprep.subr.mxu0 %v419
    %1789 = vmatpush1.msra.mxu0 %v418
    %1790 = vmatprep.subr.mxu0 %v423
    %1791 = vmatpush1.msra.mxu0 %v422
    %1792 = vmatprep.subr.mxu0 %v427
    %1793 = vmatpush1.msra.mxu0 %v426
    %1794 = vmatprep.subr.mxu0 %v431
    %1795 = vmatpush1.msra.mxu0 %v430
    %1796 = vmatprep.subr.mxu0 %v435
    %1797 = vmatpush1.msra.mxu0 %v434
    %1798 = vmatprep.subr.mxu0 %v439
    %1799 = vmatpush1.msra.mxu0 %v438
    %1800 = vmatprep.subr.mxu0 %v443
    %1801 = vmatpush1.msra.mxu0 %v442
    %1802 = vmatprep.subr.mxu0 %v447
    %1803 = vmatpush1.msra.mxu0 %v446
    %1804 = vmatprep.subr.mxu0 %v451
    %1805 = vmatpush1.msra.mxu0 %v450
    %1806 = vmatprep.subr.mxu0 %v455
    %1807 = vmatpush1.msra.mxu0 %v454
    %1808 = vmatprep.subr.mxu0 %v459
    %1809 = vmatpush1.msra.mxu0 %v458
    %1810 = vmatprep.subr.mxu0 %v463
    %1811 = vmatpush1.msra.mxu0 %v462
    %1812 = vmatprep.subr.mxu0 %v467
    %1813 = vmatpush1.msra.mxu0 %v466
    %1814 = vmatprep.subr.mxu0 %v471
    %1815 = vmatpush1.msra.mxu0 %v470
    %1816 = vmatprep.subr.mxu0 %v475
    %1817 = vmatpush1.msra.mxu0 %v474
    %1818 = vmatprep.subr.mxu0 0.0
    %1819 = vmatpush1.msra.mxu0 0.0
    %1820 = vmatprep.subr.mxu0 0.0
    %1821 = vmatpush1.msra.mxu0 0.0
    %1822 = vmatprep.subr.mxu0 0.0
    %1823 = vmatpush1.msra.mxu0 0.0
    %1824 = vmatprep.subr.mxu0 0.0
    %1825 = vmatpush1.msra.mxu0 0.0
    %1826 = vmatprep.subr.mxu0 0.0
    %1827 = vmatpush1.msra.mxu0 0.0
    %1828 = vmatprep.subr.mxu0 0.0
    %1829 = vmatpush1.msra.mxu0 0.0
    %1830 = vmatprep.subr.mxu0 0.0
    %1831 = vmatpush1.msra.mxu0 0.0
    %1832 = vmatprep.subr.mxu0 0.0
    %1833 = vmatpush1.msra.mxu0 0.0
    %1834 = vmatprep.subr.mxu0 0.0
    %1835 = vmatpush1.msra.mxu0 0.0
    %1836 = vmatprep.subr.mxu0 0.0
    %1837 = vmatpush1.msra.mxu0 0.0
    %1838 = vmatprep.subr.mxu0 0.0
    %1839 = vmatpush1.msra.mxu0 0.0
    %1840 = vmatprep.subr.mxu0 0.0
    %1841 = vmatpush1.msra.mxu0 0.0
    %1842 = vmatprep.subr.mxu0 0.0
    %1843 = vmatpush1.msra.mxu0 0.0
    %1844 = vmatprep.subr.mxu0 0.0
    %1845 = vmatpush1.msra.mxu0 0.0
    %1846 = vmatprep.subr.mxu0 0.0
    %1847 = vmatpush1.msra.mxu0 0.0
    %1848 = vmatprep.subr.mxu0 0.0
    %1849 = vmatpush1.msra.mxu0 0.0
    %1850 = vmatprep.mubr.f32.mxu0 0.0
    %1851 = vmatmul.mubr.f32.gmra.mrb[0].mxu0 %v1778
    %v1852 = vpop.f32.mrb[0].mxu0
    %v1853 = vadd.f32 0.0, %v1852
    %v1854 = vpop.f32.mrb[0].mxu0
    %v1855 = vadd.f32 0.0, %v1854
    %1856 = vdwg.mxu0
    %1857 = vmatprep.subr.mxu0 %v417
    %1858 = vmatpush1.msra.mxu0 %v416
    %1859 = vmatprep.subr.mxu0 %v421
    %1860 = vmatpush1.msra.mxu0 %v420
    %1861 = vmatprep.subr.mxu0 %v425
    %1862 = vmatpush1.msra.mxu0 %v424
    %1863 = vmatprep.subr.mxu0 %v429
    %1864 = vmatpush1.msra.mxu0 %v428
    %1865 = vmatprep.subr.mxu0 %v433
    %1866 = vmatpush1.msra.mxu0 %v432
    %1867 = vmatprep.subr.mxu0 %v437
    %1868 = vmatpush1.msra.mxu0 %v436
    %1869 = vmatprep.subr.mxu0 %v441
    %1870 = vmatpush1.msra.mxu0 %v440
    %1871 = vmatprep.subr.mxu0 %v445
    %1872 = vmatpush1.msra.mxu0 %v444
    %1873 = vmatprep.subr.mxu0 %v449
    %1874 = vmatpush1.msra.mxu0 %v448
    %1875 = vmatprep.subr.mxu0 %v453
    %1876 = vmatpush1.msra.mxu0 %v452
    %1877 = vmatprep.subr.mxu0 %v457
    %1878 = vmatpush1.msra.mxu0 %v456
    %1879 = vmatprep.subr.mxu0 %v461
    %1880 = vmatpush1.msra.mxu0 %v460
    %1881 = vmatprep.subr.mxu0 %v465
    %1882 = vmatpush1.msra.mxu0 %v464
    %1883 = vmatprep.subr.mxu0 %v469
    %1884 = vmatpush1.msra.mxu0 %v468
    %1885 = vmatprep.subr.mxu0 %v473
    %1886 = vmatpush1.msra.mxu0 %v472
    %1887 = vmatprep.subr.mxu0 %v477
    %1888 = vmatpush1.msra.mxu0 %v476
    %1889 = vmatprep.subr.mxu0 0.0
    %1890 = vmatpush1.msra.mxu0 0.0
    %1891 = vmatprep.subr.mxu0 0.0
    %1892 = vmatpush1.msra.mxu0 0.0
    %1893 = vmatprep.subr.mxu0 0.0
    %1894 = vmatpush1.msra.mxu0 0.0
    %1895 = vmatprep.subr.mxu0 0.0
    %1896 = vmatpush1.msra.mxu0 0.0
    %1897 = vmatprep.subr.mxu0 0.0
    %1898 = vmatpush1.msra.mxu0 0.0
    %1899 = vmatprep.subr.mxu0 0.0
    %1900 = vmatpush1.msra.mxu0 0.0
    %1901 = vmatprep.subr.mxu0 0.0
    %1902 = vmatpush1.msra.mxu0 0.0
    %1903 = vmatprep.subr.mxu0 0.0
    %1904 = vmatpush1.msra.mxu0 0.0
    %1905 = vmatprep.subr.mxu0 0.0
    %1906 = vmatpush1.msra.mxu0 0.0
    %1907 = vmatprep.subr.mxu0 0.0
    %1908 = vmatpush1.msra.mxu0 0.0
    %1909 = vmatprep.subr.mxu0 0.0
    %1910 = vmatpush1.msra.mxu0 0.0
    %1911 = vmatprep.subr.mxu0 0.0
    %1912 = vmatpush1.msra.mxu0 0.0
    %1913 = vmatprep.subr.mxu0 0.0
    %1914 = vmatpush1.msra.mxu0 0.0
    %1915 = vmatprep.subr.mxu0 0.0
    %1916 = vmatpush1.msra.mxu0 0.0
    %1917 = vmatprep.subr.mxu0 0.0
    %1918 = vmatpush1.msra.mxu0 0.0
    %1919 = vmatprep.subr.mxu0 0.0
    %1920 = vmatpush1.msra.mxu0 0.0
    %1921 = vmatprep.mubr.f32.mxu0 0.0
    %1922 = vmatmul.mubr.f32.gmra.mrb[0].mxu0 %v1778
    %v1923 = vpop.f32.mrb[0].mxu0
    %v1924 = vadd.f32 0.0, %v1923
    %v1925 = vpop.f32.mrb[0].mxu0
    %v1926 = vadd.f32 0.0, %v1925
    %1927 = vdwg.mxu0
    %v1928 = vadd.f32 %v1782, %v1853
    %v1929 = vadd.f32 %v1783, %v1855
    %v1930 = vadd.f32 %v1784, %v1924
    %v1931 = vadd.f32 %v1785, %v1926
    %v1932 = vxor.u32 %v1928, 2147483648
    %v1933 = vmul.f32 %v1932, 1.442695
    %v1934 = vpow.pop %v1933
    %v1935 = vadd.f32 %v1934, 1.0
    %v1936 = vrcp.pop %v1935
    %v1937 = vmul.f32 1.0, %v1936
    %v1938 = vxor.u32 %v1929, 2147483648
    %v1939 = vmul.f32 %v1938, 1.442695
    %v1940 = vpow.pop %v1939
    %v1941 = vadd.f32 %v1940, 1.0
    %v1942 = vrcp.pop %v1941
    %v1943 = vmul.f32 1.0, %v1942
    %v1944 = vtanh.pop %v1930
    %v1945 = vxor.u32 %v1931, 2147483648
    %v1946 = vmul.f32 %v1945, 1.442695
    %v1947 = vpow.pop %v1946
    %v1948 = vadd.f32 %v1947, 1.0
    %v1949 = vrcp.pop %v1948
    %v1950 = vmul.f32 1.0, %v1949
    %v1951 = vmul.f32 %v1943, %v1777
    %v1952 = vmul.f32 %v1937, %v1944
    %v1953 = vadd.f32 %v1951, %v1952
    %v1954 = vtanh.pop %v1953
    %v1955 = vmul.f32 %v1950, %v1954
    %s1956 = sadd.s32 %s404, 7
    %v1957 = vstv %s1956
    %vm1958 = vcmp.lt.s32.totalorder %v1957, %v403
    %v1959 = vsel %vm1958, 1, 0
    %1960 = vset.pattern.permute.xlu0 0
    %1961 = vperm.xlu0 %1960, %v1959
    %v1962 = vpop.permute.xlu0 %1961
    %vm1963 = vcmp.eq.s32.totalorder %v1962, 1
    %v1964 = vsel %vm1963, %v1953, %v1777
    %v1965 = vsel %vm1963, %v1955, %v1778
    %1966 = vst [vmem:[#allocation3] sm:$0xff] %v1965
    %1967 = vst [vmem:[#allocation4] sm:$0xff] %v1964
    // Predicated region
    $region46: #{tpu_custom_call.1} parent=1 // pred_check
      %p1968 = pneg %p68
    $region47: #{tpu_custom_call.1} parent=1 // pred_check_branch
      %1970 = sbr.rel (%p1968) target = $region49
    $region48: #{tpu_custom_call.1} parent=1 // pred_region
      %v1971 = vld [vmem:[#allocation10] sm:$0xff]
      %v1972 = vld [vmem:[#allocation10 + $0x8] sm:$0xff]
      %v1973 = vld [vmem:[#allocation10 + $0x10] sm:$0xff]
      %v1974 = vld [vmem:[#allocation10 + $0x18] sm:$0xff]
      %v1975 = vld [vmem:[#allocation10 + $0x20] sm:$0xff]
      %v1976 = vld [vmem:[#allocation10 + $0x28] sm:$0xff]
      %v1977 = vld [vmem:[#allocation10 + $0x30] sm:$0xff]
      %v1978 = vld [vmem:[#allocation10 + $0x38] sm:$0xff]
      %v1979 = vld [vmem:[#allocation10 + $0x40] sm:$0xff]
      %v1980 = vld [vmem:[#allocation10 + $0x48] sm:$0xff]
      %v1981 = vld [vmem:[#allocation10 + $0x50] sm:$0xff]
      %v1982 = vld [vmem:[#allocation10 + $0x58] sm:$0xff]
      %v1983 = vld [vmem:[#allocation10 + $0x60] sm:$0xff]
      %v1984 = vld [vmem:[#allocation10 + $0x68] sm:$0xff]
      %v1985 = vld [vmem:[#allocation10 + $0x70] sm:$0xff]
      %v1986 = vld [vmem:[#allocation10 + $0x78] sm:$0xff]
      %v1987 = vld [vmem:[%s6] sm:$0x1]
      %v1989 = vlaneseq
      %v1990 = vshrl.u32 %v1989, 7
      %v1991 = vsub.s32 0, %v1990
      %v1992 = vrot.slane %v1987, %v1991
      %1994 = vmatprep.subr.mxu0 0.0
      %1995 = vmatpush1.msra.mxu0 %v1971
      %1996 = vmatprep.subr.mxu0 0.0
      %1997 = vmatpush1.msra.mxu0 %v1972
      %1998 = vmatprep.subr.mxu0 0.0
      %1999 = vmatpush1.msra.mxu0 %v1973
      %2000 = vmatprep.subr.mxu0 0.0
      %2001 = vmatpush1.msra.mxu0 %v1974
      %2002 = vmatprep.subr.mxu0 0.0
      %2003 = vmatpush1.msra.mxu0 %v1975
      %2004 = vmatprep.subr.mxu0 0.0
      %2005 = vmatpush1.msra.mxu0 %v1976
      %2006 = vmatprep.subr.mxu0 0.0
      %2007 = vmatpush1.msra.mxu0 %v1977
      %2008 = vmatprep.subr.mxu0 0.0
      %2009 = vmatpush1.msra.mxu0 %v1978
      %2010 = vmatprep.subr.mxu0 0.0
      %2011 = vmatpush1.msra.mxu0 %v1979
      %2012 = vmatprep.subr.mxu0 0.0
      %2013 = vmatpush1.msra.mxu0 %v1980
      %2014 = vmatprep.subr.mxu0 0.0
      %2015 = vmatpush1.msra.mxu0 %v1981
      %2016 = vmatprep.subr.mxu0 0.0
      %2017 = vmatpush1.msra.mxu0 %v1982
      %2018 = vmatprep.subr.mxu0 0.0
      %2019 = vmatpush1.msra.mxu0 %v1983
      %2020 = vmatprep.subr.mxu0 0.0
      %2021 = vmatpush1.msra.mxu0 %v1984
      %2022 = vmatprep.subr.mxu0 0.0
      %2023 = vmatpush1.msra.mxu0 %v1985
      %2024 = vmatprep.subr.mxu0 0.0
      %2025 = vmatpush1.msra.mxu0 %v1986
      %2026 = vmatprep.subr.mxu0 0.0
      %2027 = vmatpush1.msra.mxu0 0.0
      %2028 = vmatprep.subr.mxu0 0.0
      %2029 = vmatpush1.msra.mxu0 0.0
      %2030 = vmatprep.subr.mxu0 0.0
      %2031 = vmatpush1.msra.mxu0 0.0
      %2032 = vmatprep.subr.mxu0 0.0
      %2033 = vmatpush1.msra.mxu0 0.0
      %2034 = vmatprep.subr.mxu0 0.0
      %2035 = vmatpush1.msra.mxu0 0.0
      %2036 = vmatprep.subr.mxu0 0.0
      %2037 = vmatpush1.msra.mxu0 0.0
      %2038 = vmatprep.subr.mxu0 0.0
      %2039 = vmatpush1.msra.mxu0 0.0
      %2040 = vmatprep.subr.mxu0 0.0
      %2041 = vmatpush1.msra.mxu0 0.0
      %2042 = vmatprep.subr.mxu0 0.0
      %2043 = vmatpush1.msra.mxu0 0.0
      %2044 = vmatprep.subr.mxu0 0.0
      %2045 = vmatpush1.msra.mxu0 0.0
      %2046 = vmatprep.subr.mxu0 0.0
      %2047 = vmatpush1.msra.mxu0 0.0
      %2048 = vmatprep.subr.mxu0 0.0
      %2049 = vmatpush1.msra.mxu0 0.0
      %2050 = vmatprep.subr.mxu0 0.0
      %2051 = vmatpush1.msra.mxu0 0.0
      %2052 = vmatprep.subr.mxu0 0.0
      %2053 = vmatpush1.msra.mxu0 0.0
      %2054 = vmatprep.subr.mxu0 0.0
      %2055 = vmatpush1.msra.mxu0 0.0
      %2056 = vmatprep.subr.mxu0 0.0
      %2057 = vmatpush1.msra.mxu0 0.0
      %2058 = vmatprep.mubr.f32.mxu0 0.0
      %2059 = vmatmul.mubr.f32.gmra.mrb[0].mxu0 %v1965
      %v2060 = vpop.f32.mrb[0].mxu0
      %v2061 = vadd.f32 %v1992, %v2060
      %v2062 = vpop.f32.mrb[0].mxu0
      %2063 = vdwg.mxu0
      %2064 = vst [vmem:[#allocation11] sm:$0xff] %v2061
    $region49: #{tpu_custom_call.1} parent=1 // pred_fallthru
      _
    // Predicated region
    $region50: #{tpu_custom_call.1} parent=1 // pred_check
      _
    $region51: #{tpu_custom_call.1} parent=1 // pred_check_branch
      %2066 = sbr.rel (0) target = $region53
    $region52: #{tpu_custom_call.1} parent=1 // pred_region
      %s2068 = ssub.s32 128, 128
      %2069 = vsyncadd [#allocation7], %s2068
      %s2071 = sshll.u32 [#allocation11], 4
      %s2072 = int_to_ptr.vmem [resolvable:$true] %s2071
      %2074 = dma.vmem_to_hbm [thread:$0]  %s2072, 128, %s7, [#allocation7]
    $region53: #{tpu_custom_call.1} parent=1 // pred_fallthru
      _
    // Predicated region
    $region54: #{tpu_custom_call.1} parent=1 // pred_check
      _
    $region55: #{tpu_custom_call.1} parent=1 // pred_check_branch
      %2076 = sbr.rel (0) target = $region57
    $region56: #{tpu_custom_call.1} parent=1 // pred_region
      %2077 = dma.done [#allocation7], 128
    $region57: #{tpu_custom_call.1} parent=1 // pred_fallthru
      _
    %2078 = vsyncpa [#allocation6], 1
    %2079 = vsyncpa [#allocation9], 1
    %2080 = vsyncpa [#allocation7], 1

</llo_original>
